<compile_context>
chip_gen: v6e
topology: v6e:2x2x1
jax: 0.10.0
libtpu: 0.0.40
codegen_flags: <defaults>
</compile_context>

<pallas_src>
import functools

import jax
import jax.numpy as jnp
from jax.experimental import pallas as pl
from jax.experimental.pallas import tpu as pltpu


# ----------------------------- kernel helpers ------------------------------

def _layernorm(v, g, b, eps=1e-5):
    # PyTorch nn.LayerNorm over last dim, eps=1e-5, elementwise affine.
    mu = jnp.mean(v, axis=-1, keepdims=True)
    var = jnp.mean((v - mu) ** 2, axis=-1, keepdims=True)
    return (v - mu) * jax.lax.rsqrt(var + eps) * g + b


def _gelu(x):
    # TODO(synk): PyTorch nn.GELU() uses the exact erf form; erf is not reliably
    # lowered by Mosaic, so the tanh approximation is used (rel. err ~1e-3).
    return jax.nn.gelu(x, approximate=True)


# ------------------------- fused TransformerBlock kernel -------------------

def transformer_block_kernel(x_ref, ctx_ref, mq_ref, mk_ref,
                             ln1_g_ref, ln1_b_ref,
                             wq_ref, wk_ref, wv_ref, wo_ref, bo_ref,
                             ln2_g_ref, ln2_b_ref, w1_ref, b1_ref, w2_ref, b2_ref,
                             o_ref, *, heads, dim_head):
    f32, bf16 = jnp.float32, jnp.bfloat16

    x = x_ref[...]        # (tq, Dq)  f32  query tile
    ctx = ctx_ref[...]    # (Nk, Dk)  f32  full context
    tq = x.shape[0]
    nk = ctx.shape[0]

    # keep[q, k] = (mask1[q] * mask2[k]) > 0 ; the dense (Nq, Nk) mask is built
    # in-registers from the per-token masks, never DMAed from HBM.
    keep = (mq_ref[...] * mk_ref[...]) > 0.0            # (tq, Nk) bool

    # ---- PreNorm(query) + cross-attention (context is NOT normed) ----
    xn = _layernorm(x, ln1_g_ref[...], ln1_b_ref[...])
    ctx_b = ctx.astype(bf16)
    # attention scale (dim_head ** -0.5) is pre-folded into wq at init time.
    q = jnp.dot(xn.astype(bf16), wq_ref[...], preferred_element_type=f32)   # (tq, H*Dh)
    k = jnp.dot(ctx_b, wk_ref[...], preferred_element_type=f32)             # (Nk, H*Dh)
    v = jnp.dot(ctx_b, wv_ref[...], preferred_element_type=f32)             # (Nk, H*Dh)

    # head-batched attention: operands reshaped to head-leading (H, N, Dh)
    qh = pltpu.einshape("mhd->hmd", q.reshape(tq, heads, dim_head)).astype(bf16)
    kh = pltpu.einshape("mhd->hmd", k.reshape(nk, heads, dim_head)).astype(bf16)
    vh = pltpu.einshape("mhd->hmd", v.reshape(nk, heads, dim_head)).astype(bf16)

    sim = jnp.einsum("hqd,hkd->hqk", qh, kh, preferred_element_type=f32)    # (H, tq, Nk)
    neg = -jnp.finfo(f32).max
    sim = jnp.where(keep[None, :, :], sim, neg)          # masked_fill(~mask, -max)
    sim = sim - jnp.max(sim, axis=-1, keepdims=True)     # stable softmax
    p = jnp.exp(sim)
    p = p * pl.reciprocal(jnp.sum(p, axis=-1, keepdims=True), approx=True)
    outh = jnp.einsum("hqk,hkd->hqd", p.astype(bf16), vh,
                      preferred_element_type=f32)        # (H, tq, Dh)

    attn = pltpu.einshape("hmd->mhd", outh).reshape(tq, heads * dim_head)
    attn = jnp.dot(attn.astype(bf16), wo_ref[...],
                   preferred_element_type=f32) + bo_ref[...]
    x1 = x + attn  # residual

    # ---- PreNorm + FeedForward ----
    x1n = _layernorm(x1, ln2_g_ref[...], ln2_b_ref[...])
    h1 = jnp.dot(x1n.astype(bf16), w1_ref[...], preferred_element_type=f32) + b1_ref[...]
    h1 = _gelu(h1)
    ff = jnp.dot(h1.astype(bf16), w2_ref[...], preferred_element_type=f32) + b2_ref[...]
    o_ref[...] = (x1 + ff).astype(o_ref.dtype)  # residual


PARAM_NAMES = ("ln1_g", "ln1_b", "wq", "wk", "wv", "wo", "bo",
               "ln2_g", "ln2_b", "w1", "b1", "w2", "b2")


def _pick_q_tile(n, target=256):
    """Largest query tile <= target that divides n and satisfies the (8,128) rule."""
    if n <= target:
        return n
    t = target - (target % 8)
    while t >= 8:
        if n % t == 0:
            return t
        t -= 8
    return n


def transformer_block(x, ctx, mask_q, mask_k, params, heads, dim_head):
    """Pallas call: one fused TransformerBlock, grid over (batch, Nq tiles)."""
    B, nq, dq = x.shape
    _, nk, dk = ctx.shape
    tq = _pick_q_tile(nq)

    kernel = functools.partial(transformer_block_kernel,
                               heads=heads, dim_head=dim_head)

    def w_spec(a):  # whole weight resident in VMEM, constant block index
        nd = a.ndim
        return pl.BlockSpec(a.shape, lambda b, i, _nd=nd: (0,) * _nd)

    in_specs = [
        pl.BlockSpec((None, tq, dq), lambda b, i: (b, i, 0)),   # x (query tile)
        pl.BlockSpec((None, nk, dk), lambda b, i: (b, 0, 0)),   # context (full)
        pl.BlockSpec((None, tq, 1), lambda b, i: (b, i, 0)),    # query-token mask
        pl.BlockSpec((None, 1, nk), lambda b, i: (b, 0, 0)),    # key-token mask
    ] + [w_spec(params[n]) for n in PARAM_NAMES]

    # TODO(synk): for production sizes, set vmem_limit_bytes per-chip and use a
    # flash-style Nk loop; at these shapes the defaults are already ample.
    return pl.pallas_call(
        kernel,
        out_shape=jax.ShapeDtypeStruct((B, nq, dq), x.dtype),
        grid_spec=pltpu.PrefetchScalarGridSpec(
            num_scalar_prefetch=0,
            grid=(B, nq // tq),
            in_specs=in_specs,
            out_specs=pl.BlockSpec((None, tq, dq), lambda b, i: (b, i, 0)),
        ),
        compiler_params=pltpu.CompilerParams(
            dimension_semantics=("parallel", "parallel")),
    )(x, ctx, mask_q, mask_k, *[params[n] for n in PARAM_NAMES])


# ---------------------------- parameter init -------------------------------

def init_block_params(key, query_dim, kv_dim, heads, dim_head, pf_dim):
    inner = heads * dim_head
    ks = jax.random.split(key, 9)

    def lin_w(k, fan_in, fan_out):
        lim = 1.0 / (fan_in ** 0.5)
        w = jax.random.uniform(k, (fan_in, fan_out), jnp.float32, -lim, lim)
        return w.astype(jnp.bfloat16)          # bf16 MXU operands, f32 accumulation

    def lin_b(k, fan_in, fan_out):
        lim = 1.0 / (fan_in ** 0.5)
        return jax.random.uniform(k, (1, fan_out), jnp.float32, -lim, lim)

    # to_q (no bias); the attention scale dim_head**-0.5 is folded into wq.
    lim_q = 1.0 / (query_dim ** 0.5)
    wq = jax.random.uniform(ks[0], (query_dim, inner), jnp.float32, -lim_q, lim_q)
    wq = (wq * (dim_head ** -0.5)).astype(jnp.bfloat16)

    return {
        "ln1_g": jnp.ones((1, query_dim), jnp.float32),
        "ln1_b": jnp.zeros((1, query_dim), jnp.float32),
        "wq":   wq,
        "wk":   lin_w(ks[1], kv_dim, inner),           # first half of to_kv (no bias)
        "wv":   lin_w(ks[2], kv_dim, inner),           # second half of to_kv (no bias)
        "wo":   lin_w(ks[3], inner, query_dim),        # to_out
        "bo":   lin_b(ks[4], inner, query_dim),
        "ln2_g": jnp.ones((1, query_dim), jnp.float32),
        "ln2_b": jnp.zeros((1, query_dim), jnp.float32),
        "w1":   lin_w(ks[5], query_dim, pf_dim),       # FeedForward linear 1
        "b1":   lin_b(ks[6], query_dim, pf_dim),
        "w2":   lin_w(ks[7], pf_dim, query_dim),       # FeedForward linear 2
        "b2":   lin_b(ks[8], pf_dim, query_dim),
    }


def init_deep_perceiver(key, input_dim_1, input_dim_2, depth, heads, dim_head):
    layers = []
    for _ in range(depth):
        k1, k2, key = jax.random.split(key, 3)
        p1 = init_block_params(k1, input_dim_1, input_dim_2, heads, dim_head, input_dim_1 * 4)
        p2 = init_block_params(k2, input_dim_2, input_dim_1, heads, dim_head, input_dim_2 * 4)
        layers.append((p1, p2))
    return layers


# --------------------------- DeepPerceiver forward -------------------------

def deep_perceiver_forward(data1, data2, mask1, mask2, layers, heads, dim_head):
    # mask = einsum('bi,bj->bij', mask1, mask2) and its transpose are rebuilt
    # inside the kernel from the per-token masks; only (B,N,1)/(B,1,N) views
    # are ever passed (no dense (B,Nq,Nk) HBM tensor, no transpose).
    m1q, m1k = mask1[:, :, None], mask1[:, None, :]
    m2q, m2k = mask2[:, :, None], mask2[:, None, :]
    x, y = data1, data2
    # TODO(synk): cross-call DMA prefetch of the next layer's weights (P10) would
    # hide per-layer weight loads behind the previous layer's compute.
    for p1, p2 in layers:
        x, y = (transformer_block(x, y, m1q, m2k, p1, heads, dim_head),
                transformer_block(y, x, m2q, m1k, p2, heads, dim_head))
    return x


# --------------------------------- main -------------------------------------

if __name__ == "__main__":
    B, N1, N2 = 2, 8, 8
    D1, D2 = 32, 16            # input_dim_1, input_dim_2
    depth, heads, dim_head = 2, 2, 8

    key = jax.random.PRNGKey(0)
    kd1, kd2, km1, km2, kp = jax.random.split(key, 5)

    data1 = jax.random.normal(kd1, (B, N1, D1), jnp.float32)
    data2 = jax.random.normal(kd2, (B, N2, D2), jnp.float32)
    mask1 = (jax.random.uniform(km1, (B, N1)) > 0.2).astype(jnp.float32)
    mask2 = (jax.random.uniform(km2, (B, N2)) > 0.2).astype(jnp.float32)

    layers = init_deep_perceiver(kp, D1, D2, depth, heads, dim_head)

    out = deep_perceiver_forward(data1, data2, mask1, mask2, layers, heads, dim_head)
    out = jax.block_until_ready(out)
    assert out.shape == (B, N1, D1) and out.dtype == jnp.float32
    assert bool(jnp.all(jnp.isfinite(out)))
    print("KERNEL_OK")
</pallas_src>

<mosaic_0001>
module attributes {stable_mosaic.version = 11 : i64} {
  func.func @transformer_block_kernel(%arg0: i32, %arg1: i32, %arg2: memref<1x8x32xf32, #tpu.memory_space<vmem>>, %arg3: memref<1x8x16xf32, #tpu.memory_space<vmem>>, %arg4: memref<1x8x1xf32, #tpu.memory_space<vmem>>, %arg5: memref<1x1x8xf32, #tpu.memory_space<vmem>>, %arg6: memref<1x32xf32, #tpu.memory_space<vmem>>, %arg7: memref<1x32xf32, #tpu.memory_space<vmem>>, %arg8: memref<32x16xbf16, #tpu.memory_space<vmem>>, %arg9: memref<16x16xbf16, #tpu.memory_space<vmem>>, %arg10: memref<16x16xbf16, #tpu.memory_space<vmem>>, %arg11: memref<16x32xbf16, #tpu.memory_space<vmem>>, %arg12: memref<1x32xf32, #tpu.memory_space<vmem>>, %arg13: memref<1x32xf32, #tpu.memory_space<vmem>>, %arg14: memref<1x32xf32, #tpu.memory_space<vmem>>, %arg15: memref<32x128xbf16, #tpu.memory_space<vmem>>, %arg16: memref<1x128xf32, #tpu.memory_space<vmem>>, %arg17: memref<128x32xbf16, #tpu.memory_space<vmem>>, %arg18: memref<1x32xf32, #tpu.memory_space<vmem>>, %arg19: memref<1x8x32xf32, #tpu.memory_space<vmem>>) attributes {dimension_semantics = [#tpu.dimension_semantics<parallel>, #tpu.dimension_semantics<parallel>], iteration_bounds = array<i64: 2, 1>, scalar_prefetch = 0 : i64, scratch_operands = 0 : i64, tpu.core_type = #tpu.core_type<tc>, window_params = [{transform_indices = @transform_0, window_bounds = array<i64: 1, 8, 32>}, {transform_indices = @transform_1, window_bounds = array<i64: 1, 8, 16>}, {transform_indices = @transform_2, window_bounds = array<i64: 1, 8, 1>}, {transform_indices = @transform_3, window_bounds = array<i64: 1, 1, 8>}, {pipeline_mode = #tpu.pipeline_mode<synchronous>, transform_indices = @transform_4, window_bounds = array<i64: 1, 32>}, {pipeline_mode = #tpu.pipeline_mode<synchronous>, transform_indices = @transform_5, window_bounds = array<i64: 1, 32>}, {pipeline_mode = #tpu.pipeline_mode<synchronous>, transform_indices = @transform_6, window_bounds = array<i64: 32, 16>}, {pipeline_mode = #tpu.pipeline_mode<synchronous>, transform_indices = @transform_7, window_bounds = array<i64: 16, 16>}, {pipeline_mode = #tpu.pipeline_mode<synchronous>, transform_indices = @transform_8, window_bounds = array<i64: 16, 16>}, {pipeline_mode = #tpu.pipeline_mode<synchronous>, transform_indices = @transform_9, window_bounds = array<i64: 16, 32>}, {pipeline_mode = #tpu.pipeline_mode<synchronous>, transform_indices = @transform_10, window_bounds = array<i64: 1, 32>}, {pipeline_mode = #tpu.pipeline_mode<synchronous>, transform_indices = @transform_11, window_bounds = array<i64: 1, 32>}, {pipeline_mode = #tpu.pipeline_mode<synchronous>, transform_indices = @transform_12, window_bounds = array<i64: 1, 32>}, {pipeline_mode = #tpu.pipeline_mode<synchronous>, transform_indices = @transform_13, window_bounds = array<i64: 32, 128>}, {pipeline_mode = #tpu.pipeline_mode<synchronous>, transform_indices = @transform_14, window_bounds = array<i64: 1, 128>}, {pipeline_mode = #tpu.pipeline_mode<synchronous>, transform_indices = @transform_15, window_bounds = array<i64: 128, 32>}, {pipeline_mode = #tpu.pipeline_mode<synchronous>, transform_indices = @transform_16, window_bounds = array<i64: 1, 32>}, {transform_indices = @transform_17, window_bounds = array<i64: 1, 8, 32>}]} {
    %c0 = arith.constant 0 : index
    %c0_0 = arith.constant 0 : index
    %c0_1 = arith.constant 0 : index
    %0 = vector.load %arg2[%c0, %c0_0, %c0_1] : memref<1x8x32xf32, #tpu.memory_space<vmem>>, vector<1x8x32xf32>
    %1 = vector.shape_cast %0 : vector<1x8x32xf32> to vector<8x32xf32>
    %c0_2 = arith.constant 0 : index
    %c0_3 = arith.constant 0 : index
    %c0_4 = arith.constant 0 : index
    %2 = vector.load %arg3[%c0_2, %c0_3, %c0_4] : memref<1x8x16xf32, #tpu.memory_space<vmem>>, vector<1x8x16xf32>
    %3 = vector.shape_cast %2 : vector<1x8x16xf32> to vector<8x16xf32>
    %c0_5 = arith.constant 0 : index
    %c0_6 = arith.constant 0 : index
    %c0_7 = arith.constant 0 : index
    %4 = vector.load %arg4[%c0_5, %c0_6, %c0_7] : memref<1x8x1xf32, #tpu.memory_space<vmem>>, vector<1x8x1xf32>
    %5 = vector.shape_cast %4 : vector<1x8x1xf32> to vector<8x1xf32>
    %c0_8 = arith.constant 0 : index
    %c0_9 = arith.constant 0 : index
    %c0_10 = arith.constant 0 : index
    %6 = vector.load %arg5[%c0_8, %c0_9, %c0_10] : memref<1x1x8xf32, #tpu.memory_space<vmem>>, vector<1x1x8xf32>
    %7 = vector.shape_cast %6 : vector<1x1x8xf32> to vector<1x8xf32>
    %8 = vector.broadcast %5 : vector<8x1xf32> to vector<8x8xf32>
    %9 = vector.broadcast %7 : vector<1x8xf32> to vector<8x8xf32>
    %10 = arith.mulf %8, %9 : vector<8x8xf32>
    %cst = arith.constant 0.000000e+00 : f32
    %11 = vector.broadcast %cst : f32 to vector<8x8xf32>
    %12 = arith.cmpf ogt, %10, %11 : vector<8x8xf32>
    %c0_11 = arith.constant 0 : index
    %c0_12 = arith.constant 0 : index
    %13 = vector.load %arg6[%c0_11, %c0_12] : memref<1x32xf32, #tpu.memory_space<vmem>>, vector<1x32xf32>
    %c0_13 = arith.constant 0 : index
    %c0_14 = arith.constant 0 : index
    %14 = vector.load %arg7[%c0_13, %c0_14] : memref<1x32xf32, #tpu.memory_space<vmem>>, vector<1x32xf32>
    %cst_15 = arith.constant dense<0.000000e+00> : vector<8xf32>
    %15 = vector.multi_reduction <add>, %1, %cst_15 [1] : vector<8x32xf32> to vector<8xf32>
    %16 = vector.shape_cast %15 : vector<8xf32> to vector<8x1xf32>
    %cst_16 = arith.constant 3.200000e+01 : f32
    %17 = vector.broadcast %cst_16 : f32 to vector<8x1xf32>
    %18 = arith.divf %16, %17 : vector<8x1xf32>
    %19 = vector.broadcast %18 : vector<8x1xf32> to vector<8x32xf32>
    %20 = arith.subf %1, %19 : vector<8x32xf32>
    %21 = arith.mulf %20, %20 : vector<8x32xf32>
    %cst_17 = arith.constant dense<0.000000e+00> : vector<8xf32>
    %22 = vector.multi_reduction <add>, %21, %cst_17 [1] : vector<8x32xf32> to vector<8xf32>
    %23 = vector.shape_cast %22 : vector<8xf32> to vector<8x1xf32>
    %cst_18 = arith.constant 3.200000e+01 : f32
    %24 = vector.broadcast %cst_18 : f32 to vector<8x1xf32>
    %25 = arith.divf %23, %24 : vector<8x1xf32>
    %26 = vector.broadcast %18 : vector<8x1xf32> to vector<8x32xf32>
    %27 = arith.subf %1, %26 : vector<8x32xf32>
    %cst_19 = arith.constant 9.99999974E-6 : f32
    %28 = vector.broadcast %cst_19 : f32 to vector<8x1xf32>
    %29 = arith.addf %25, %28 : vector<8x1xf32>
    %30 = math.rsqrt %29 : vector<8x1xf32>
    %31 = vector.broadcast %30 : vector<8x1xf32> to vector<8x32xf32>
    %32 = arith.mulf %27, %31 : vector<8x32xf32>
    %33 = vector.broadcast %13 : vector<1x32xf32> to vector<8x32xf32>
    %34 = arith.mulf %32, %33 : vector<8x32xf32>
    %35 = vector.broadcast %14 : vector<1x32xf32> to vector<8x32xf32>
    %36 = arith.addf %34, %35 : vector<8x32xf32>
    %37 = arith.truncf %3 : vector<8x16xf32> to vector<8x16xbf16>
    %38 = arith.truncf %36 : vector<8x32xf32> to vector<8x32xbf16>
    %c0_20 = arith.constant 0 : index
    %c0_21 = arith.constant 0 : index
    %39 = vector.load %arg8[%c0_20, %c0_21] : memref<32x16xbf16, #tpu.memory_space<vmem>>, vector<32x16xbf16>
    %cst_22 = arith.constant dense<0.000000e+00> : vector<8x16xf32>
    %40 = tpu.matmul %38, %39, %cst_22 {dimension_numbers = #tpu.dot_dimension_numbers<[1], [0], [0], [1], [0, 0, 1, 1], [], []>} : vector<8x32xbf16>, vector<32x16xbf16>, vector<8x16xf32> -> vector<8x16xf32>
    %c0_23 = arith.constant 0 : index
    %c0_24 = arith.constant 0 : index
    %41 = vector.load %arg9[%c0_23, %c0_24] : memref<16x16xbf16, #tpu.memory_space<vmem>>, vector<16x16xbf16>
    %cst_25 = arith.constant dense<0.000000e+00> : vector<8x16xf32>
    %42 = tpu.matmul %37, %41, %cst_25 {dimension_numbers = #tpu.dot_dimension_numbers<[1], [0], [0], [1], [0, 0, 1, 1], [], []>} : vector<8x16xbf16>, vector<16x16xbf16>, vector<8x16xf32> -> vector<8x16xf32>
    %c0_26 = arith.constant 0 : index
    %c0_27 = arith.constant 0 : index
    %43 = vector.load %arg10[%c0_26, %c0_27] : memref<16x16xbf16, #tpu.memory_space<vmem>>, vector<16x16xbf16>
    %cst_28 = arith.constant dense<0.000000e+00> : vector<8x16xf32>
    %44 = tpu.matmul %37, %43, %cst_28 {dimension_numbers = #tpu.dot_dimension_numbers<[1], [0], [0], [1], [0, 0, 1, 1], [], []>} : vector<8x16xbf16>, vector<16x16xbf16>, vector<8x16xf32> -> vector<8x16xf32>
    %45 = vector.shape_cast %40 : vector<8x16xf32> to vector<8x2x8xf32>
    %46 = tpu.transpose %45, [1, 0, 2] : vector<8x2x8xf32> -> vector<2x8x8xf32>
    %47 = arith.truncf %46 : vector<2x8x8xf32> to vector<2x8x8xbf16>
    %48 = vector.shape_cast %42 : vector<8x16xf32> to vector<8x2x8xf32>
    %49 = tpu.transpose %48, [1, 0, 2] : vector<8x2x8xf32> -> vector<2x8x8xf32>
    %50 = arith.truncf %49 : vector<2x8x8xf32> to vector<2x8x8xbf16>
    %51 = vector.shape_cast %44 : vector<8x16xf32> to vector<8x2x8xf32>
    %52 = tpu.transpose %51, [1, 0, 2] : vector<8x2x8xf32> -> vector<2x8x8xf32>
    %53 = arith.truncf %52 : vector<2x8x8xf32> to vector<2x8x8xbf16>
    "tpu.trace_start"() <{level = 10 : i32, message = "hqd,hkd->hqk"}> : () -> ()
    %cst_29 = arith.constant dense<0.000000e+00> : vector<2x8x8xf32>
    %54 = tpu.matmul %47, %50, %cst_29 {dimension_numbers = #tpu.dot_dimension_numbers<[2], [2], [1], [1], [0, 0, 0, 1, 1, 1], [0], [0]>} : vector<2x8x8xbf16>, vector<2x8x8xbf16>, vector<2x8x8xf32> -> vector<2x8x8xf32>
    "tpu.trace_stop"() : () -> ()
    %55 = vector.shape_cast %12 : vector<8x8xi1> to vector<1x8x8xi1>
    %cst_30 = arith.constant -3.40282347E+38 : f32
    %56 = vector.shape_cast %55 : vector<1x8x8xi1> to vector<1x8x8xi1>
    %57 = vector.broadcast %56 : vector<1x8x8xi1> to vector<2x8x8xi1>
    %58 = vector.broadcast %cst_30 : f32 to vector<2x8x8xf32>
    %59 = arith.select %57, %54, %58 : vector<2x8x8xi1>, vector<2x8x8xf32>
    %cst_31 = arith.constant dense<0xFF800000> : vector<2x8xf32>
    %60 = vector.multi_reduction <maximumf>, %59, %cst_31 [2] : vector<2x8x8xf32> to vector<2x8xf32>
    %61 = vector.shape_cast %60 : vector<2x8xf32> to vector<2x8x1xf32>
    %62 = vector.broadcast %61 : vector<2x8x1xf32> to vector<2x8x8xf32>
    %63 = arith.subf %59, %62 : vector<2x8x8xf32>
    %64 = math.exp %63 : vector<2x8x8xf32>
    %cst_32 = arith.constant dense<0.000000e+00> : vector<2x8xf32>
    %65 = vector.multi_reduction <add>, %64, %cst_32 [2] : vector<2x8x8xf32> to vector<2x8xf32>
    %66 = vector.shape_cast %65 : vector<2x8xf32> to vector<2x8x1xf32>
    %67 = tpu.reciprocal %66 {approx = true} : vector<2x8x1xf32> -> vector<2x8x1xf32>
    %68 = vector.broadcast %67 : vector<2x8x1xf32> to vector<2x8x8xf32>
    %69 = arith.mulf %64, %68 : vector<2x8x8xf32>
    %70 = arith.truncf %69 : vector<2x8x8xf32> to vector<2x8x8xbf16>
    "tpu.trace_start"() <{level = 10 : i32, message = "hqk,hkd->hqd"}> : () -> ()
    %cst_33 = arith.constant dense<0.000000e+00> : vector<2x8x8xf32>
    %71 = tpu.matmul %70, %53, %cst_33 {dimension_numbers = #tpu.dot_dimension_numbers<[2], [1], [1], [2], [0, 0, 0, 1, 1, 2], [0], [0]>} : vector<2x8x8xbf16>, vector<2x8x8xbf16>, vector<2x8x8xf32> -> vector<2x8x8xf32>
    "tpu.trace_stop"() : () -> ()
    %72 = tpu.transpose %71, [1, 0, 2] : vector<2x8x8xf32> -> vector<8x2x8xf32>
    %73 = vector.shape_cast %72 : vector<8x2x8xf32> to vector<8x16xf32>
    %74 = arith.truncf %73 : vector<8x16xf32> to vector<8x16xbf16>
    %c0_34 = arith.constant 0 : index
    %c0_35 = arith.constant 0 : index
    %75 = vector.load %arg11[%c0_34, %c0_35] : memref<16x32xbf16, #tpu.memory_space<vmem>>, vector<16x32xbf16>
    %cst_36 = arith.constant dense<0.000000e+00> : vector<8x32xf32>
    %76 = tpu.matmul %74, %75, %cst_36 {dimension_numbers = #tpu.dot_dimension_numbers<[1], [0], [0], [1], [0, 0, 1, 1], [], []>} : vector<8x16xbf16>, vector<16x32xbf16>, vector<8x32xf32> -> vector<8x32xf32>
    %c0_37 = arith.constant 0 : index
    %c0_38 = arith.constant 0 : index
    %77 = vector.load %arg12[%c0_37, %c0_38] : memref<1x32xf32, #tpu.memory_space<vmem>>, vector<1x32xf32>
    %78 = vector.broadcast %77 : vector<1x32xf32> to vector<8x32xf32>
    %79 = arith.addf %76, %78 : vector<8x32xf32>
    %80 = arith.addf %1, %79 : vector<8x32xf32>
    %c0_39 = arith.constant 0 : index
    %c0_40 = arith.constant 0 : index
    %81 = vector.load %arg13[%c0_39, %c0_40] : memref<1x32xf32, #tpu.memory_space<vmem>>, vector<1x32xf32>
    %c0_41 = arith.constant 0 : index
    %c0_42 = arith.constant 0 : index
    %82 = vector.load %arg14[%c0_41, %c0_42] : memref<1x32xf32, #tpu.memory_space<vmem>>, vector<1x32xf32>
    %cst_43 = arith.constant dense<0.000000e+00> : vector<8xf32>
    %83 = vector.multi_reduction <add>, %80, %cst_43 [1] : vector<8x32xf32> to vector<8xf32>
    %84 = vector.shape_cast %83 : vector<8xf32> to vector<8x1xf32>
    %cst_44 = arith.constant 3.200000e+01 : f32
    %85 = vector.broadcast %cst_44 : f32 to vector<8x1xf32>
    %86 = arith.divf %84, %85 : vector<8x1xf32>
    %87 = vector.broadcast %86 : vector<8x1xf32> to vector<8x32xf32>
    %88 = arith.subf %80, %87 : vector<8x32xf32>
    %89 = arith.mulf %88, %88 : vector<8x32xf32>
    %cst_45 = arith.constant dense<0.000000e+00> : vector<8xf32>
    %90 = vector.multi_reduction <add>, %89, %cst_45 [1] : vector<8x32xf32> to vector<8xf32>
    %91 = vector.shape_cast %90 : vector<8xf32> to vector<8x1xf32>
    %cst_46 = arith.constant 3.200000e+01 : f32
    %92 = vector.broadcast %cst_46 : f32 to vector<8x1xf32>
    %93 = arith.divf %91, %92 : vector<8x1xf32>
    %94 = vector.broadcast %86 : vector<8x1xf32> to vector<8x32xf32>
    %95 = arith.subf %80, %94 : vector<8x32xf32>
    %cst_47 = arith.constant 9.99999974E-6 : f32
    %96 = vector.broadcast %cst_47 : f32 to vector<8x1xf32>
    %97 = arith.addf %93, %96 : vector<8x1xf32>
    %98 = math.rsqrt %97 : vector<8x1xf32>
    %99 = vector.broadcast %98 : vector<8x1xf32> to vector<8x32xf32>
    %100 = arith.mulf %95, %99 : vector<8x32xf32>
    %101 = vector.broadcast %81 : vector<1x32xf32> to vector<8x32xf32>
    %102 = arith.mulf %100, %101 : vector<8x32xf32>
    %103 = vector.broadcast %82 : vector<1x32xf32> to vector<8x32xf32>
    %104 = arith.addf %102, %103 : vector<8x32xf32>
    %105 = arith.truncf %104 : vector<8x32xf32> to vector<8x32xbf16>
    %c0_48 = arith.constant 0 : index
    %c0_49 = arith.constant 0 : index
    %106 = vector.load %arg15[%c0_48, %c0_49] : memref<32x128xbf16, #tpu.memory_space<vmem>>, vector<32x128xbf16>
    %cst_50 = arith.constant dense<0.000000e+00> : vector<8x128xf32>
    %107 = tpu.matmul %105, %106, %cst_50 {dimension_numbers = #tpu.dot_dimension_numbers<[1], [0], [0], [1], [0, 0, 1, 1], [], []>} : vector<8x32xbf16>, vector<32x128xbf16>, vector<8x128xf32> -> vector<8x128xf32>
    %c0_51 = arith.constant 0 : index
    %c0_52 = arith.constant 0 : index
    %108 = vector.load %arg16[%c0_51, %c0_52] : memref<1x128xf32, #tpu.memory_space<vmem>>, vector<1x128xf32>
    %109 = vector.broadcast %108 : vector<1x128xf32> to vector<8x128xf32>
    %110 = arith.addf %107, %109 : vector<8x128xf32>
    %111 = arith.mulf %110, %110 : vector<8x128xf32>
    %112 = arith.mulf %110, %111 : vector<8x128xf32>
    %cst_53 = arith.constant 4.471500e-02 : f32
    %113 = vector.broadcast %cst_53 : f32 to vector<8x128xf32>
    %114 = arith.mulf %113, %112 : vector<8x128xf32>
    %115 = arith.addf %110, %114 : vector<8x128xf32>
    %cst_54 = arith.constant 0.797884583 : f32
    %116 = vector.broadcast %cst_54 : f32 to vector<8x128xf32>
    %117 = arith.mulf %116, %115 : vector<8x128xf32>
    %118 = math.tanh %117 : vector<8x128xf32>
    %cst_55 = arith.constant 1.000000e+00 : f32
    %119 = vector.broadcast %cst_55 : f32 to vector<8x128xf32>
    %120 = arith.addf %119, %118 : vector<8x128xf32>
    %cst_56 = arith.constant 5.000000e-01 : f32
    %121 = vector.broadcast %cst_56 : f32 to vector<8x128xf32>
    %122 = arith.mulf %121, %120 : vector<8x128xf32>
    %123 = arith.mulf %110, %122 : vector<8x128xf32>
    %124 = arith.truncf %123 : vector<8x128xf32> to vector<8x128xbf16>
    %c0_57 = arith.constant 0 : index
    %c0_58 = arith.constant 0 : index
    %125 = vector.load %arg17[%c0_57, %c0_58] : memref<128x32xbf16, #tpu.memory_space<vmem>>, vector<128x32xbf16>
    %cst_59 = arith.constant dense<0.000000e+00> : vector<8x32xf32>
    %126 = tpu.matmul %124, %125, %cst_59 {dimension_numbers = #tpu.dot_dimension_numbers<[1], [0], [0], [1], [0, 0, 1, 1], [], []>} : vector<8x128xbf16>, vector<128x32xbf16>, vector<8x32xf32> -> vector<8x32xf32>
    %c0_60 = arith.constant 0 : index
    %c0_61 = arith.constant 0 : index
    %127 = vector.load %arg18[%c0_60, %c0_61] : memref<1x32xf32, #tpu.memory_space<vmem>>, vector<1x32xf32>
    %128 = vector.broadcast %127 : vector<1x32xf32> to vector<8x32xf32>
    %129 = arith.addf %126, %128 : vector<8x32xf32>
    %130 = arith.addf %80, %129 : vector<8x32xf32>
    %c0_62 = arith.constant 0 : index
    %c0_63 = arith.constant 0 : index
    %c0_64 = arith.constant 0 : index
    %131 = vector.load %arg19[%c0_62, %c0_63, %c0_64] : memref<1x8x32xf32, #tpu.memory_space<vmem>>, vector<1x8x32xf32>
    %132 = vector.shape_cast %131 : vector<1x8x32xf32> to vector<8x32xf32>
    %133 = vector.shape_cast %130 : vector<8x32xf32> to vector<1x8x32xf32>
    tpu.vector_store %arg19[%c0_62, %c0_63, %c0_64], %133 {strides = array<i32>} : memref<1x8x32xf32, #tpu.memory_space<vmem>>, vector<1x8x32xf32>,
    return
  }
  func.func @transform_0(%arg0: i32, %arg1: i32) -> (i32, i32, i32) {
    %c0_i32 = arith.constant 0 : i32
    %c0_i32_0 = arith.constant 0 : i32
    return %arg0, %arg1, %c0_i32 : i32, i32, i32
  }
  func.func @transform_1(%arg0: i32, %arg1: i32) -> (i32, i32, i32) {
    %c0_i32 = arith.constant 0 : i32
    %c0_i32_0 = arith.constant 0 : i32
    %c0_i32_1 = arith.constant 0 : i32
    return %arg0, %c0_i32, %c0_i32_0 : i32, i32, i32
  }
  func.func @transform_2(%arg0: i32, %arg1: i32) -> (i32, i32, i32) {
    %c0_i32 = arith.constant 0 : i32
    %c0_i32_0 = arith.constant 0 : i32
    return %arg0, %arg1, %c0_i32 : i32, i32, i32
  }
  func.func @transform_3(%arg0: i32, %arg1: i32) -> (i32, i32, i32) {
    %c0_i32 = arith.constant 0 : i32
    %c0_i32_0 = arith.constant 0 : i32
    %c0_i32_1 = arith.constant 0 : i32
    return %arg0, %c0_i32, %c0_i32_0 : i32, i32, i32
  }
  func.func @transform_4(%arg0: i32, %arg1: i32) -> (i32, i32) {
    %c0_i32 = arith.constant 0 : i32
    %c0_i32_0 = arith.constant 0 : i32
    %c0_i32_1 = arith.constant 0 : i32
    return %c0_i32, %c0_i32_0 : i32, i32
  }
  func.func @transform_5(%arg0: i32, %arg1: i32) -> (i32, i32) {
    %c0_i32 = arith.constant 0 : i32
    %c0_i32_0 = arith.constant 0 : i32
    %c0_i32_1 = arith.constant 0 : i32
    return %c0_i32, %c0_i32_0 : i32, i32
  }
  func.func @transform_6(%arg0: i32, %arg1: i32) -> (i32, i32) {
    %c0_i32 = arith.constant 0 : i32
    %c0_i32_0 = arith.constant 0 : i32
    %c0_i32_1 = arith.constant 0 : i32
    return %c0_i32, %c0_i32_0 : i32, i32
  }
  func.func @transform_7(%arg0: i32, %arg1: i32) -> (i32, i32) {
    %c0_i32 = arith.constant 0 : i32
    %c0_i32_0 = arith.constant 0 : i32
    %c0_i32_1 = arith.constant 0 : i32
    return %c0_i32, %c0_i32_0 : i32, i32
  }
  func.func @transform_8(%arg0: i32, %arg1: i32) -> (i32, i32) {
    %c0_i32 = arith.constant 0 : i32
    %c0_i32_0 = arith.constant 0 : i32
    %c0_i32_1 = arith.constant 0 : i32
    return %c0_i32, %c0_i32_0 : i32, i32
  }
  func.func @transform_9(%arg0: i32, %arg1: i32) -> (i32, i32) {
    %c0_i32 = arith.constant 0 : i32
    %c0_i32_0 = arith.constant 0 : i32
    %c0_i32_1 = arith.constant 0 : i32
    return %c0_i32, %c0_i32_0 : i32, i32
  }
  func.func @transform_10(%arg0: i32, %arg1: i32) -> (i32, i32) {
    %c0_i32 = arith.constant 0 : i32
    %c0_i32_0 = arith.constant 0 : i32
    %c0_i32_1 = arith.constant 0 : i32
    return %c0_i32, %c0_i32_0 : i32, i32
  }
  func.func @transform_11(%arg0: i32, %arg1: i32) -> (i32, i32) {
    %c0_i32 = arith.constant 0 : i32
    %c0_i32_0 = arith.constant 0 : i32
    %c0_i32_1 = arith.constant 0 : i32
    return %c0_i32, %c0_i32_0 : i32, i32
  }
  func.func @transform_12(%arg0: i32, %arg1: i32) -> (i32, i32) {
    %c0_i32 = arith.constant 0 : i32
    %c0_i32_0 = arith.constant 0 : i32
    %c0_i32_1 = arith.constant 0 : i32
    return %c0_i32, %c0_i32_0 : i32, i32
  }
  func.func @transform_13(%arg0: i32, %arg1: i32) -> (i32, i32) {
    %c0_i32 = arith.constant 0 : i32
    %c0_i32_0 = arith.constant 0 : i32
    %c0_i32_1 = arith.constant 0 : i32
    return %c0_i32, %c0_i32_0 : i32, i32
  }
  func.func @transform_14(%arg0: i32, %arg1: i32) -> (i32, i32) {
    %c0_i32 = arith.constant 0 : i32
    %c0_i32_0 = arith.constant 0 : i32
    %c0_i32_1 = arith.constant 0 : i32
    return %c0_i32, %c0_i32_0 : i32, i32
  }
  func.func @transform_15(%arg0: i32, %arg1: i32) -> (i32, i32) {
    %c0_i32 = arith.constant 0 : i32
    %c0_i32_0 = arith.constant 0 : i32
    %c0_i32_1 = arith.constant 0 : i32
    return %c0_i32, %c0_i32_0 : i32, i32
  }
  func.func @transform_16(%arg0: i32, %arg1: i32) -> (i32, i32) {
    %c0_i32 = arith.constant 0 : i32
    %c0_i32_0 = arith.constant 0 : i32
    %c0_i32_1 = arith.constant 0 : i32
    return %c0_i32, %c0_i32_0 : i32, i32
  }
  func.func @transform_17(%arg0: i32, %arg1: i32) -> (i32, i32, i32) {
    %c0_i32 = arith.constant 0 : i32
    %c0_i32_0 = arith.constant 0 : i32
    return %arg0, %arg1, %c0_i32 : i32, i32, i32
  }
}

</mosaic_0001>

<llo_original>
// kernel: tpu_custom_call.1
$region0: #{tpu_custom_call.1}
  #allocation0 [shape = 'u32[]', space=smem, size = 0x4, offset = 0x4, fixed_abs, tag = 'smem constant byte address 0x4 - core index']
  #allocation1 [shape = 'u32[144,128]{1,0:T(1,128)}', space=vmem, size = 0x12000, scoped, tag = 'internal scratch']
  %s0 = inlined_call_operand.vmem [shape: f32[2,8,32], index: 0, kind: input, shape index: {}]
  %s1 = inlined_call_operand.vmem [shape: f32[2,8,16], index: 1, kind: input, shape index: {}]
  %s2 = inlined_call_operand.vmem [shape: f32[2,8,1], index: 2, kind: input, shape index: {}]
  %s3 = inlined_call_operand.vmem [shape: f32[2,1,8], index: 3, kind: input, shape index: {}]
  %s4 = inlined_call_operand.vmem [shape: f32[1,32], index: 4, kind: input, shape index: {}]
  %s5 = inlined_call_operand.vmem [shape: f32[1,32], index: 5, kind: input, shape index: {}]
  %s6 = inlined_call_operand.vmem [shape: bf16[32,16], index: 6, kind: input, shape index: {}]
  %s7 = inlined_call_operand.vmem [shape: bf16[16,16], index: 7, kind: input, shape index: {}]
  %s8 = inlined_call_operand.vmem [shape: bf16[16,16], index: 8, kind: input, shape index: {}]
  %s9 = inlined_call_operand.vmem [shape: bf16[16,32], index: 9, kind: input, shape index: {}]
  %s10 = inlined_call_operand.vmem [shape: f32[1,32], index: 10, kind: input, shape index: {}]
  %s11 = inlined_call_operand.vmem [shape: f32[1,32], index: 11, kind: input, shape index: {}]
  %s12 = inlined_call_operand.vmem [shape: f32[1,32], index: 12, kind: input, shape index: {}]
  %s13 = inlined_call_operand.vmem [shape: bf16[32,128], index: 13, kind: input, shape index: {}]
  %s14 = inlined_call_operand.vmem [shape: f32[1,128], index: 14, kind: input, shape index: {}]
  %s15 = inlined_call_operand.vmem [shape: bf16[128,32], index: 15, kind: input, shape index: {}]
  %s16 = inlined_call_operand.vmem [shape: f32[1,32], index: 16, kind: input, shape index: {}]
  %s17 = inlined_call_operand.hbm [shape: f32[2,8,32], index: 17, kind: output, shape index: {}]
  %s18 = sld [smem:[#allocation0]]
  $region101: #{tpu_custom_call.1} parent=0
    _
  %s20 = ssub.s32 1, %s18
  %s21 = scalar_select 0, %s20, %s18
  $region1: #{tpu_custom_call.1} parent=0
    #allocation2 [shape = 'u8[8192]{0}', space=vmem, size = 0x2000, scoped, tag = 'output window, operand 0']
    #allocation3 [shape = 's32[2]{0}', space=sflag, size = 0x8, scoped, tag = 'scoped memory for tpu_custom_call.1']
    %22 = vsyncpa [#allocation3], 0
    %s23 = scalar_lea.sflag [#allocation3], 1
    %24 = vsyncpa %s23, 0
    loop: start=0, step=1, limit=4
    $region2: #{tpu_custom_call.1} parent=1 // loop_pre_header
      _
    $region3: #{tpu_custom_call.1} parent=1 // loop_header
      %s26 = sphi 0, %s30
      %p27 = scmp.ge.s32.totalorder %s26, 4
      %s33 = sphi 0, %s45
      %s34 = sphi 0, %s41
      %s35 = sphi 0, %s33
      %s36 = sphi 0, %s34
      %s37 = sphi 0, %s35
      %s38 = sphi 0, %s36
      %s50 = sphi 0, %s52
      %s53 = sphi 0, %s50
      %s54 = sphi 0, %s53
      %s70 = sphi 0, %s54
      %s76 = sphi 0, %s78
      %s79 = sphi 0, %s76
      %s80 = sphi 0, %s79
      %s96 = sphi 0, %s80
      %s104 = sphi 0, %s106
      %s107 = sphi 0, %s104
      %s108 = sphi 0, %s107
      %s124 = sphi 0, %s108
      %s130 = sphi 0, %s132
      %s133 = sphi 0, %s130
      %s134 = sphi 0, %s133
      %s150 = sphi 0, %s134
      %s154 = sphi 0, %s154
      %s156 = sphi 0, %s154
      %s157 = sphi 0, %s156
      %s171 = sphi 0, %s157
      %s175 = sphi 0, %s175
      %s177 = sphi 0, %s175
      %s178 = sphi 0, %s177
      %s192 = sphi 0, %s178
      %s196 = sphi 0, %s196
      %s198 = sphi 0, %s196
      %s199 = sphi 0, %s198
      %s213 = sphi 0, %s199
      %s217 = sphi 0, %s217
      %s219 = sphi 0, %s217
      %s220 = sphi 0, %s219
      %s234 = sphi 0, %s220
      %s238 = sphi 0, %s238
      %s240 = sphi 0, %s238
      %s241 = sphi 0, %s240
      %s255 = sphi 0, %s241
      %s259 = sphi 0, %s259
      %s261 = sphi 0, %s259
      %s262 = sphi 0, %s261
      %s276 = sphi 0, %s262
      %s280 = sphi 0, %s280
      %s282 = sphi 0, %s280
      %s283 = sphi 0, %s282
      %s297 = sphi 0, %s283
      %s301 = sphi 0, %s301
      %s303 = sphi 0, %s301
      %s304 = sphi 0, %s303
      %s318 = sphi 0, %s304
      %s322 = sphi 0, %s322
      %s324 = sphi 0, %s322
      %s325 = sphi 0, %s324
      %s339 = sphi 0, %s325
      %s343 = sphi 0, %s343
      %s345 = sphi 0, %s343
      %s346 = sphi 0, %s345
      %s360 = sphi 0, %s346
      %s364 = sphi 0, %s364
      %s366 = sphi 0, %s364
      %s367 = sphi 0, %s366
      %s381 = sphi 0, %s367
      %s385 = sphi 0, %s385
      %s387 = sphi 0, %s385
      %s388 = sphi 0, %s387
      %s402 = sphi 0, %s388
      %s406 = sphi 0, %s406
      %s408 = sphi 0, %s406
      %s409 = sphi 0, %s408
      %s423 = sphi 0, %s409
      %s431 = sphi 0, %s433
      %s434 = sphi 0, %s431
      %s435 = sphi 0, %s434
      %s451 = sphi 0, %s435
    $region4: #{tpu_custom_call.1} parent=1 // loop_header_branch
      %29 = sbr.rel (%p27) target = $region8
    $region5: #{tpu_custom_call.1} parent=1 // loop_body
      %s31 = ssub.s32 %s26, 1
      %s32 = ssub.s32 %s26, 2
      %s39 = sadd.s32 1, %s34
      %p40 = scmp.ge.s32.totalorder %s39, 1
      %s41 = scalar_select %p40, 0, %s39
      %s42 = sadd.s32 1, %s33
      %s43 = scalar_select %p40, %s42, %s33
      %p44 = scmp.ge.s32.totalorder %s43, 2
      %s45 = scalar_select %p44, 0, %s43
      %s46 = ssub.s32 %s33, %s45
      %s47 = ssub.s32 %s34, %s41
      %s48 = sor.u32 %s46, %s47
      %p49 = scmp.eq.s32.totalorder %s48, 0
      %s51 = sadd.s32 %s50, 1
      %s52 = scalar_select %p49, %s50, %s51
      %p55 = pneg %p49
      %p56 = scmp.eq.s32.totalorder %s26, 1
      %p57 = por %p55, %p56
      %p58 = scmp.ne.s32.totalorder %s50, %s53
      %p59 = scmp.eq.s32.totalorder %s26, 0
      %p60 = por %p58, %p59
      %p61 = scmp.ne.s32.totalorder %s50, %s53
      %p62 = scmp.eq.s32.totalorder %s31, 1
      %p63 = por %p61, %p62
      %p64 = scmp.ne.s32.totalorder %s53, %s54
      %p65 = scmp.eq.s32.totalorder %s31, 0
      %p66 = por %p64, %p65
      %p67 = scmp.ne.s32.totalorder %s53, %s54
      %p68 = scmp.eq.s32.totalorder %s32, 1
      %p69 = por %p67, %p68
      %p71 = scmp.ne.s32.totalorder %s54, %s70
      %p72 = scmp.eq.s32.totalorder %s32, 0
      %p73 = por %p71, %p72
      %s74 = ssub.s32 %s33, %s45
      %p75 = scmp.eq.s32.totalorder %s74, 0
      %s77 = sadd.s32 %s76, 1
      %s78 = scalar_select %p75, %s76, %s77
      %p81 = pneg %p75
      %p82 = scmp.eq.s32.totalorder %s26, 1
      %p83 = por %p81, %p82
      %p84 = scmp.ne.s32.totalorder %s76, %s79
      %p85 = scmp.eq.s32.totalorder %s26, 0
      %p86 = por %p84, %p85
      %p87 = scmp.ne.s32.totalorder %s76, %s79
      %p88 = scmp.eq.s32.totalorder %s31, 1
      %p89 = por %p87, %p88
      %p90 = scmp.ne.s32.totalorder %s79, %s80
      %p91 = scmp.eq.s32.totalorder %s31, 0
      %p92 = por %p90, %p91
      %p93 = scmp.ne.s32.totalorder %s79, %s80
      %p94 = scmp.eq.s32.totalorder %s32, 1
      %p95 = por %p93, %p94
      %p97 = scmp.ne.s32.totalorder %s80, %s96
      %p98 = scmp.eq.s32.totalorder %s32, 0
      %p99 = por %p97, %p98
      %s100 = ssub.s32 %s33, %s45
      %s101 = ssub.s32 %s34, %s41
      %s102 = sor.u32 %s100, %s101
      %p103 = scmp.eq.s32.totalorder %s102, 0
      %s105 = sadd.s32 %s104, 1
      %s106 = scalar_select %p103, %s104, %s105
      %p109 = pneg %p103
      %p110 = scmp.eq.s32.totalorder %s26, 1
      %p111 = por %p109, %p110
      %p112 = scmp.ne.s32.totalorder %s104, %s107
      %p113 = scmp.eq.s32.totalorder %s26, 0
      %p114 = por %p112, %p113
      %p115 = scmp.ne.s32.totalorder %s104, %s107
      %p116 = scmp.eq.s32.totalorder %s31, 1
      %p117 = por %p115, %p116
      %p118 = scmp.ne.s32.totalorder %s107, %s108
      %p119 = scmp.eq.s32.totalorder %s31, 0
      %p120 = por %p118, %p119
      %p121 = scmp.ne.s32.totalorder %s107, %s108
      %p122 = scmp.eq.s32.totalorder %s32, 1
      %p123 = por %p121, %p122
      %p125 = scmp.ne.s32.totalorder %s108, %s124
      %p126 = scmp.eq.s32.totalorder %s32, 0
      %p127 = por %p125, %p126
      %s128 = ssub.s32 %s33, %s45
      %p129 = scmp.eq.s32.totalorder %s128, 0
      %s131 = sadd.s32 %s130, 1
      %s132 = scalar_select %p129, %s130, %s131
      %p135 = pneg %p129
      %p136 = scmp.eq.s32.totalorder %s26, 1
      %p137 = por %p135, %p136
      %p138 = scmp.ne.s32.totalorder %s130, %s133
      %p139 = scmp.eq.s32.totalorder %s26, 0
      %p140 = por %p138, %p139
      %p141 = scmp.ne.s32.totalorder %s130, %s133
      %p142 = scmp.eq.s32.totalorder %s31, 1
      %p143 = por %p141, %p142
      %p144 = scmp.ne.s32.totalorder %s133, %s134
      %p145 = scmp.eq.s32.totalorder %s31, 0
      %p146 = por %p144, %p145
      %p147 = scmp.ne.s32.totalorder %s133, %s134
      %p148 = scmp.eq.s32.totalorder %s32, 1
      %p149 = por %p147, %p148
      %p151 = scmp.ne.s32.totalorder %s134, %s150
      %p152 = scmp.eq.s32.totalorder %s32, 0
      %p153 = por %p151, %p152
      %s155 = sadd.s32 %s154, 1
      %p158 = scmp.eq.s32.totalorder %s26, 1
      %p159 = scmp.ne.s32.totalorder %s154, %s156
      %p160 = scmp.eq.s32.totalorder %s26, 0
      %p161 = por %p159, %p160
      %p162 = scmp.ne.s32.totalorder %s154, %s156
      %p163 = scmp.eq.s32.totalorder %s31, 1
      %p164 = por %p162, %p163
      %p165 = scmp.ne.s32.totalorder %s156, %s157
      %p166 = scmp.eq.s32.totalorder %s31, 0
      %p167 = por %p165, %p166
      %p168 = scmp.ne.s32.totalorder %s156, %s157
      %p169 = scmp.eq.s32.totalorder %s32, 1
      %p170 = por %p168, %p169
      %p172 = scmp.ne.s32.totalorder %s157, %s171
      %p173 = scmp.eq.s32.totalorder %s32, 0
      %p174 = por %p172, %p173
      %s176 = sadd.s32 %s175, 1
      %p179 = scmp.eq.s32.totalorder %s26, 1
      %p180 = scmp.ne.s32.totalorder %s175, %s177
      %p181 = scmp.eq.s32.totalorder %s26, 0
      %p182 = por %p180, %p181
      %p183 = scmp.ne.s32.totalorder %s175, %s177
      %p184 = scmp.eq.s32.totalorder %s31, 1
      %p185 = por %p183, %p184
      %p186 = scmp.ne.s32.totalorder %s177, %s178
      %p187 = scmp.eq.s32.totalorder %s31, 0
      %p188 = por %p186, %p187
      %p189 = scmp.ne.s32.totalorder %s177, %s178
      %p190 = scmp.eq.s32.totalorder %s32, 1
      %p191 = por %p189, %p190
      %p193 = scmp.ne.s32.totalorder %s178, %s192
      %p194 = scmp.eq.s32.totalorder %s32, 0
      %p195 = por %p193, %p194
      %s197 = sadd.s32 %s196, 1
      %p200 = scmp.eq.s32.totalorder %s26, 1
      %p201 = scmp.ne.s32.totalorder %s196, %s198
      %p202 = scmp.eq.s32.totalorder %s26, 0
      %p203 = por %p201, %p202
      %p204 = scmp.ne.s32.totalorder %s196, %s198
      %p205 = scmp.eq.s32.totalorder %s31, 1
      %p206 = por %p204, %p205
      %p207 = scmp.ne.s32.totalorder %s198, %s199
      %p208 = scmp.eq.s32.totalorder %s31, 0
      %p209 = por %p207, %p208
      %p210 = scmp.ne.s32.totalorder %s198, %s199
      %p211 = scmp.eq.s32.totalorder %s32, 1
      %p212 = por %p210, %p211
      %p214 = scmp.ne.s32.totalorder %s199, %s213
      %p215 = scmp.eq.s32.totalorder %s32, 0
      %p216 = por %p214, %p215
      %s218 = sadd.s32 %s217, 1
      %p221 = scmp.eq.s32.totalorder %s26, 1
      %p222 = scmp.ne.s32.totalorder %s217, %s219
      %p223 = scmp.eq.s32.totalorder %s26, 0
      %p224 = por %p222, %p223
      %p225 = scmp.ne.s32.totalorder %s217, %s219
      %p226 = scmp.eq.s32.totalorder %s31, 1
      %p227 = por %p225, %p226
      %p228 = scmp.ne.s32.totalorder %s219, %s220
      %p229 = scmp.eq.s32.totalorder %s31, 0
      %p230 = por %p228, %p229
      %p231 = scmp.ne.s32.totalorder %s219, %s220
      %p232 = scmp.eq.s32.totalorder %s32, 1
      %p233 = por %p231, %p232
      %p235 = scmp.ne.s32.totalorder %s220, %s234
      %p236 = scmp.eq.s32.totalorder %s32, 0
      %p237 = por %p235, %p236
      %s239 = sadd.s32 %s238, 1
      %p242 = scmp.eq.s32.totalorder %s26, 1
      %p243 = scmp.ne.s32.totalorder %s238, %s240
      %p244 = scmp.eq.s32.totalorder %s26, 0
      %p245 = por %p243, %p244
      %p246 = scmp.ne.s32.totalorder %s238, %s240
      %p247 = scmp.eq.s32.totalorder %s31, 1
      %p248 = por %p246, %p247
      %p249 = scmp.ne.s32.totalorder %s240, %s241
      %p250 = scmp.eq.s32.totalorder %s31, 0
      %p251 = por %p249, %p250
      %p252 = scmp.ne.s32.totalorder %s240, %s241
      %p253 = scmp.eq.s32.totalorder %s32, 1
      %p254 = por %p252, %p253
      %p256 = scmp.ne.s32.totalorder %s241, %s255
      %p257 = scmp.eq.s32.totalorder %s32, 0
      %p258 = por %p256, %p257
      %s260 = sadd.s32 %s259, 1
      %p263 = scmp.eq.s32.totalorder %s26, 1
      %p264 = scmp.ne.s32.totalorder %s259, %s261
      %p265 = scmp.eq.s32.totalorder %s26, 0
      %p266 = por %p264, %p265
      %p267 = scmp.ne.s32.totalorder %s259, %s261
      %p268 = scmp.eq.s32.totalorder %s31, 1
      %p269 = por %p267, %p268
      %p270 = scmp.ne.s32.totalorder %s261, %s262
      %p271 = scmp.eq.s32.totalorder %s31, 0
      %p272 = por %p270, %p271
      %p273 = scmp.ne.s32.totalorder %s261, %s262
      %p274 = scmp.eq.s32.totalorder %s32, 1
      %p275 = por %p273, %p274
      %p277 = scmp.ne.s32.totalorder %s262, %s276
      %p278 = scmp.eq.s32.totalorder %s32, 0
      %p279 = por %p277, %p278
      %s281 = sadd.s32 %s280, 1
      %p284 = scmp.eq.s32.totalorder %s26, 1
      %p285 = scmp.ne.s32.totalorder %s280, %s282
      %p286 = scmp.eq.s32.totalorder %s26, 0
      %p287 = por %p285, %p286
      %p288 = scmp.ne.s32.totalorder %s280, %s282
      %p289 = scmp.eq.s32.totalorder %s31, 1
      %p290 = por %p288, %p289
      %p291 = scmp.ne.s32.totalorder %s282, %s283
      %p292 = scmp.eq.s32.totalorder %s31, 0
      %p293 = por %p291, %p292
      %p294 = scmp.ne.s32.totalorder %s282, %s283
      %p295 = scmp.eq.s32.totalorder %s32, 1
      %p296 = por %p294, %p295
      %p298 = scmp.ne.s32.totalorder %s283, %s297
      %p299 = scmp.eq.s32.totalorder %s32, 0
      %p300 = por %p298, %p299
      %s302 = sadd.s32 %s301, 1
      %p305 = scmp.eq.s32.totalorder %s26, 1
      %p306 = scmp.ne.s32.totalorder %s301, %s303
      %p307 = scmp.eq.s32.totalorder %s26, 0
      %p308 = por %p306, %p307
      %p309 = scmp.ne.s32.totalorder %s301, %s303
      %p310 = scmp.eq.s32.totalorder %s31, 1
      %p311 = por %p309, %p310
      %p312 = scmp.ne.s32.totalorder %s303, %s304
      %p313 = scmp.eq.s32.totalorder %s31, 0
      %p314 = por %p312, %p313
      %p315 = scmp.ne.s32.totalorder %s303, %s304
      %p316 = scmp.eq.s32.totalorder %s32, 1
      %p317 = por %p315, %p316
      %p319 = scmp.ne.s32.totalorder %s304, %s318
      %p320 = scmp.eq.s32.totalorder %s32, 0
      %p321 = por %p319, %p320
      %s323 = sadd.s32 %s322, 1
      %p326 = scmp.eq.s32.totalorder %s26, 1
      %p327 = scmp.ne.s32.totalorder %s322, %s324
      %p328 = scmp.eq.s32.totalorder %s26, 0
      %p329 = por %p327, %p328
      %p330 = scmp.ne.s32.totalorder %s322, %s324
      %p331 = scmp.eq.s32.totalorder %s31, 1
      %p332 = por %p330, %p331
      %p333 = scmp.ne.s32.totalorder %s324, %s325
      %p334 = scmp.eq.s32.totalorder %s31, 0
      %p335 = por %p333, %p334
      %p336 = scmp.ne.s32.totalorder %s324, %s325
      %p337 = scmp.eq.s32.totalorder %s32, 1
      %p338 = por %p336, %p337
      %p340 = scmp.ne.s32.totalorder %s325, %s339
      %p341 = scmp.eq.s32.totalorder %s32, 0
      %p342 = por %p340, %p341
      %s344 = sadd.s32 %s343, 1
      %p347 = scmp.eq.s32.totalorder %s26, 1
      %p348 = scmp.ne.s32.totalorder %s343, %s345
      %p349 = scmp.eq.s32.totalorder %s26, 0
      %p350 = por %p348, %p349
      %p351 = scmp.ne.s32.totalorder %s343, %s345
      %p352 = scmp.eq.s32.totalorder %s31, 1
      %p353 = por %p351, %p352
      %p354 = scmp.ne.s32.totalorder %s345, %s346
      %p355 = scmp.eq.s32.totalorder %s31, 0
      %p356 = por %p354, %p355
      %p357 = scmp.ne.s32.totalorder %s345, %s346
      %p358 = scmp.eq.s32.totalorder %s32, 1
      %p359 = por %p357, %p358
      %p361 = scmp.ne.s32.totalorder %s346, %s360
      %p362 = scmp.eq.s32.totalorder %s32, 0
      %p363 = por %p361, %p362
      %s365 = sadd.s32 %s364, 1
      %p368 = scmp.eq.s32.totalorder %s26, 1
      %p369 = scmp.ne.s32.totalorder %s364, %s366
      %p370 = scmp.eq.s32.totalorder %s26, 0
      %p371 = por %p369, %p370
      %p372 = scmp.ne.s32.totalorder %s364, %s366
      %p373 = scmp.eq.s32.totalorder %s31, 1
      %p374 = por %p372, %p373
      %p375 = scmp.ne.s32.totalorder %s366, %s367
      %p376 = scmp.eq.s32.totalorder %s31, 0
      %p377 = por %p375, %p376
      %p378 = scmp.ne.s32.totalorder %s366, %s367
      %p379 = scmp.eq.s32.totalorder %s32, 1
      %p380 = por %p378, %p379
      %p382 = scmp.ne.s32.totalorder %s367, %s381
      %p383 = scmp.eq.s32.totalorder %s32, 0
      %p384 = por %p382, %p383
      %s386 = sadd.s32 %s385, 1
      %p389 = scmp.eq.s32.totalorder %s26, 1
      %p390 = scmp.ne.s32.totalorder %s385, %s387
      %p391 = scmp.eq.s32.totalorder %s26, 0
      %p392 = por %p390, %p391
      %p393 = scmp.ne.s32.totalorder %s385, %s387
      %p394 = scmp.eq.s32.totalorder %s31, 1
      %p395 = por %p393, %p394
      %p396 = scmp.ne.s32.totalorder %s387, %s388
      %p397 = scmp.eq.s32.totalorder %s31, 0
      %p398 = por %p396, %p397
      %p399 = scmp.ne.s32.totalorder %s387, %s388
      %p400 = scmp.eq.s32.totalorder %s32, 1
      %p401 = por %p399, %p400
      %p403 = scmp.ne.s32.totalorder %s388, %s402
      %p404 = scmp.eq.s32.totalorder %s32, 0
      %p405 = por %p403, %p404
      %s407 = sadd.s32 %s406, 1
      %p410 = scmp.eq.s32.totalorder %s26, 1
      %p411 = scmp.ne.s32.totalorder %s406, %s408
      %p412 = scmp.eq.s32.totalorder %s26, 0
      %p413 = por %p411, %p412
      %p414 = scmp.ne.s32.totalorder %s406, %s408
      %p415 = scmp.eq.s32.totalorder %s31, 1
      %p416 = por %p414, %p415
      %p417 = scmp.ne.s32.totalorder %s408, %s409
      %p418 = scmp.eq.s32.totalorder %s31, 0
      %p419 = por %p417, %p418
      %p420 = scmp.ne.s32.totalorder %s408, %s409
      %p421 = scmp.eq.s32.totalorder %s32, 1
      %p422 = por %p420, %p421
      %p424 = scmp.ne.s32.totalorder %s409, %s423
      %p425 = scmp.eq.s32.totalorder %s32, 0
      %p426 = por %p424, %p425
      %s427 = ssub.s32 %s33, %s45
      %s428 = ssub.s32 %s34, %s41
      %s429 = sor.u32 %s427, %s428
      %p430 = scmp.eq.s32.totalorder %s429, 0
      %s432 = sadd.s32 %s431, 1
      %s433 = scalar_select %p430, %s431, %s432
      %p436 = pneg %p430
      %p437 = scmp.eq.s32.totalorder %s26, 1
      %p438 = por %p436, %p437
      %p439 = scmp.ne.s32.totalorder %s431, %s434
      %p440 = scmp.eq.s32.totalorder %s26, 0
      %p441 = por %p439, %p440
      %p442 = scmp.ne.s32.totalorder %s431, %s434
      %p443 = scmp.eq.s32.totalorder %s31, 1
      %p444 = por %p442, %p443
      %p445 = scmp.ne.s32.totalorder %s434, %s435
      %p446 = scmp.eq.s32.totalorder %s31, 0
      %p447 = por %p445, %p446
      %p448 = scmp.ne.s32.totalorder %s434, %s435
      %p449 = scmp.eq.s32.totalorder %s32, 1
      %p450 = por %p448, %p449
      %p452 = scmp.ne.s32.totalorder %s435, %s451
      %p453 = scmp.eq.s32.totalorder %s32, 0
      %p454 = por %p452, %p453
      %p455 = scmp.le.s32.totalorder 1, %s26
      %p456 = scmp.lt.s32.totalorder %s26, 3
      %p457 = pnand %p455, %p456
      %p458 = pneg %p457
      // Predicated region
      $region9: #{tpu_custom_call.1} parent=5 // pred_check
        _
      $region10: #{tpu_custom_call.1} parent=5 // pred_check_branch
        %460 = sbr.rel (%p457) target = $region12
      $region11: #{tpu_custom_call.1} parent=5 // pred_region
        %s461 = ssub.s32 %s26, 1
        // Predicated region
        $region13: #{tpu_custom_call.1} parent=11 // pred_check
          %p462 = pneg %p167
        $region14: #{tpu_custom_call.1} parent=11 // pred_check_branch
          %464 = sbr.rel (%p462) target = $region16
        $region15: #{tpu_custom_call.1} parent=11 // pred_region
          _
        $region16: #{tpu_custom_call.1} parent=11 // pred_fallthru
          _
        // Predicated region
        $region17: #{tpu_custom_call.1} parent=11 // pred_check
          %p465 = pneg %p188
        $region18: #{tpu_custom_call.1} parent=11 // pred_check_branch
          %467 = sbr.rel (%p465) target = $region20
        $region19: #{tpu_custom_call.1} parent=11 // pred_region
          _
        $region20: #{tpu_custom_call.1} parent=11 // pred_fallthru
          _
        // Predicated region
        $region21: #{tpu_custom_call.1} parent=11 // pred_check
          %p468 = pneg %p209
        $region22: #{tpu_custom_call.1} parent=11 // pred_check_branch
          %470 = sbr.rel (%p468) target = $region24
        $region23: #{tpu_custom_call.1} parent=11 // pred_region
          _
        $region24: #{tpu_custom_call.1} parent=11 // pred_fallthru
          _
        // Predicated region
        $region25: #{tpu_custom_call.1} parent=11 // pred_check
          %p471 = pneg %p230
        $region26: #{tpu_custom_call.1} parent=11 // pred_check_branch
          %473 = sbr.rel (%p471) target = $region28
        $region27: #{tpu_custom_call.1} parent=11 // pred_region
          _
        $region28: #{tpu_custom_call.1} parent=11 // pred_fallthru
          _
        // Predicated region
        $region29: #{tpu_custom_call.1} parent=11 // pred_check
          %p474 = pneg %p251
        $region30: #{tpu_custom_call.1} parent=11 // pred_check_branch
          %476 = sbr.rel (%p474) target = $region32
        $region31: #{tpu_custom_call.1} parent=11 // pred_region
          _
        $region32: #{tpu_custom_call.1} parent=11 // pred_fallthru
          _
        // Predicated region
        $region33: #{tpu_custom_call.1} parent=11 // pred_check
          %p477 = pneg %p272
        $region34: #{tpu_custom_call.1} parent=11 // pred_check_branch
          %479 = sbr.rel (%p477) target = $region36
        $region35: #{tpu_custom_call.1} parent=11 // pred_region
          _
        $region36: #{tpu_custom_call.1} parent=11 // pred_fallthru
          _
        // Predicated region
        $region37: #{tpu_custom_call.1} parent=11 // pred_check
          %p480 = pneg %p293
        $region38: #{tpu_custom_call.1} parent=11 // pred_check_branch
          %482 = sbr.rel (%p480) target = $region40
        $region39: #{tpu_custom_call.1} parent=11 // pred_region
          _
        $region40: #{tpu_custom_call.1} parent=11 // pred_fallthru
          _
        // Predicated region
        $region41: #{tpu_custom_call.1} parent=11 // pred_check
          %p483 = pneg %p314
        $region42: #{tpu_custom_call.1} parent=11 // pred_check_branch
          %485 = sbr.rel (%p483) target = $region44
        $region43: #{tpu_custom_call.1} parent=11 // pred_region
          _
        $region44: #{tpu_custom_call.1} parent=11 // pred_fallthru
          _
        // Predicated region
        $region45: #{tpu_custom_call.1} parent=11 // pred_check
          %p486 = pneg %p335
        $region46: #{tpu_custom_call.1} parent=11 // pred_check_branch
          %488 = sbr.rel (%p486) target = $region48
        $region47: #{tpu_custom_call.1} parent=11 // pred_region
          _
        $region48: #{tpu_custom_call.1} parent=11 // pred_fallthru
          _
        // Predicated region
        $region49: #{tpu_custom_call.1} parent=11 // pred_check
          %p489 = pneg %p356
        $region50: #{tpu_custom_call.1} parent=11 // pred_check_branch
          %491 = sbr.rel (%p489) target = $region52
        $region51: #{tpu_custom_call.1} parent=11 // pred_region
          _
        $region52: #{tpu_custom_call.1} parent=11 // pred_fallthru
          _
        // Predicated region
        $region53: #{tpu_custom_call.1} parent=11 // pred_check
          %p492 = pneg %p377
        $region54: #{tpu_custom_call.1} parent=11 // pred_check_branch
          %494 = sbr.rel (%p492) target = $region56
        $region55: #{tpu_custom_call.1} parent=11 // pred_region
          _
        $region56: #{tpu_custom_call.1} parent=11 // pred_fallthru
          _
        // Predicated region
        $region57: #{tpu_custom_call.1} parent=11 // pred_check
          %p495 = pneg %p398
        $region58: #{tpu_custom_call.1} parent=11 // pred_check_branch
          %497 = sbr.rel (%p495) target = $region60
        $region59: #{tpu_custom_call.1} parent=11 // pred_region
          _
        $region60: #{tpu_custom_call.1} parent=11 // pred_fallthru
          _
        // Predicated region
        $region61: #{tpu_custom_call.1} parent=11 // pred_check
          %p498 = pneg %p419
        $region62: #{tpu_custom_call.1} parent=11 // pred_check_branch
          %500 = sbr.rel (%p498) target = $region64
        $region63: #{tpu_custom_call.1} parent=11 // pred_region
          _
        $region64: #{tpu_custom_call.1} parent=11 // pred_fallthru
          _
      $region12: #{tpu_custom_call.1} parent=5 // pred_fallthru
        _
      %p501 = scmp.lt.s32.totalorder %s26, 2
      // Predicated region
      $region65: #{tpu_custom_call.1} parent=5 // pred_check
        %p502 = pneg %p501
      $region66: #{tpu_custom_call.1} parent=5 // pred_check_branch
        %504 = sbr.rel (%p502) target = $region68
      $region67: #{tpu_custom_call.1} parent=5 // pred_region
        // Predicated region
        $region69: #{tpu_custom_call.1} parent=67 // pred_check
          %p505 = pneg %p60
        $region70: #{tpu_custom_call.1} parent=67 // pred_check_branch
          %507 = sbr.rel (%p505) target = $region72
        $region71: #{tpu_custom_call.1} parent=67 // pred_region
          %p508 = scmp.lt.s32.totalorder %s33, 1
          %s509 = scalar_select %p508, %s33, 1
          %p510 = scmp.lt.s32.totalorder %s34, 0
          %s511 = scalar_select %p510, %s34, 0
          %s512 = sadd.s32 %s511, %s509
          %s513 = smul.addr %s512, 8
          %s514 = scalar_lea.vmem %s0, %s513
        $region72: #{tpu_custom_call.1} parent=67 // pred_fallthru
          _
        // Predicated region
        $region73: #{tpu_custom_call.1} parent=67 // pred_check
          %p515 = pneg %p86
        $region74: #{tpu_custom_call.1} parent=67 // pred_check_branch
          %517 = sbr.rel (%p515) target = $region76
        $region75: #{tpu_custom_call.1} parent=67 // pred_region
          %p518 = scmp.lt.s32.totalorder %s33, 1
          %s519 = scalar_select %p518, %s33, 1
          %s520 = smul.addr %s519, 8
          %s521 = scalar_lea.vmem %s1, %s520
        $region76: #{tpu_custom_call.1} parent=67 // pred_fallthru
          _
        // Predicated region
        $region77: #{tpu_custom_call.1} parent=67 // pred_check
          %p522 = pneg %p114
        $region78: #{tpu_custom_call.1} parent=67 // pred_check_branch
          %524 = sbr.rel (%p522) target = $region80
        $region79: #{tpu_custom_call.1} parent=67 // pred_region
          %p525 = scmp.lt.s32.totalorder %s33, 1
          %s526 = scalar_select %p525, %s33, 1
          %p527 = scmp.lt.s32.totalorder %s34, 0
          %s528 = scalar_select %p527, %s34, 0
          %s529 = sadd.s32 %s528, %s526
          %s530 = smul.addr %s529, 8
          %s531 = scalar_lea.vmem %s2, %s530
        $region80: #{tpu_custom_call.1} parent=67 // pred_fallthru
          _
        // Predicated region
        $region81: #{tpu_custom_call.1} parent=67 // pred_check
          %p532 = pneg %p140
        $region82: #{tpu_custom_call.1} parent=67 // pred_check_branch
          %534 = sbr.rel (%p532) target = $region84
        $region83: #{tpu_custom_call.1} parent=67 // pred_region
          %p535 = scmp.lt.s32.totalorder %s33, 1
          %s536 = scalar_select %p535, %s33, 1
          %s537 = scalar_lea.vmem %s3, %s536
        $region84: #{tpu_custom_call.1} parent=67 // pred_fallthru
          _
      $region68: #{tpu_custom_call.1} parent=5 // pred_fallthru
        _
      %p538 = scmp.le.s32.totalorder 1, %s26
      %p539 = scmp.lt.s32.totalorder %s26, 3
      %p540 = pnand %p538, %p539
      %p541 = pneg %p540
      // Predicated region
      $region85: #{tpu_custom_call.1} parent=5 // pred_check
        _
      $region86: #{tpu_custom_call.1} parent=5 // pred_check_branch
        %543 = sbr.rel (%p540) target = $region88
      $region87: #{tpu_custom_call.1} parent=5 // pred_region
        %s544 = ssub.s32 %s26, 1
        %p545 = scmp.lt.s32.totalorder %s35, 1
        %s546 = scalar_select %p545, %s35, 1
        %p547 = scmp.lt.s32.totalorder %s36, 0
        %s548 = scalar_select %p547, %s36, 0
        %s549 = sadd.s32 %s548, %s546
        %s550 = smul.addr %s549, 8
        %s551 = scalar_lea.vmem %s0, %s550
        %p552 = pneg %p66
        %p553 = pneg %p63
        %p554 = scmp.lt.s32.totalorder %s35, 1
        %s555 = scalar_select %p554, %s35, 1
        %s556 = smul.addr %s555, 8
        %s557 = scalar_lea.vmem %s1, %s556
        %p558 = pneg %p92
        %p559 = pneg %p89
        %p560 = scmp.lt.s32.totalorder %s35, 1
        %s561 = scalar_select %p560, %s35, 1
        %p562 = scmp.lt.s32.totalorder %s36, 0
        %s563 = scalar_select %p562, %s36, 0
        %s564 = sadd.s32 %s563, %s561
        %s565 = smul.addr %s564, 8
        %s566 = scalar_lea.vmem %s2, %s565
        %p567 = pneg %p120
        %p568 = pneg %p117
        %p569 = scmp.lt.s32.totalorder %s35, 1
        %s570 = scalar_select %p569, %s35, 1
        %s571 = scalar_lea.vmem %s3, %s570
        %p572 = pneg %p146
        %p573 = pneg %p143
        %p574 = pneg %p167
        %p575 = pneg %p164
        %p576 = pneg %p188
        %p577 = pneg %p185
        %p578 = pneg %p209
        %p579 = pneg %p206
        %p580 = pneg %p230
        %p581 = pneg %p227
        %p582 = pneg %p251
        %p583 = pneg %p248
        %p584 = pneg %p272
        %p585 = pneg %p269
        %p586 = pneg %p293
        %p587 = pneg %p290
        %p588 = pneg %p314
        %p589 = pneg %p311
        %p590 = pneg %p335
        %p591 = pneg %p332
        %p592 = pneg %p356
        %p593 = pneg %p353
        %p594 = pneg %p377
        %p595 = pneg %p374
        %p596 = pneg %p398
        %p597 = pneg %p395
        %p598 = pneg %p419
        %p599 = pneg %p416
        %p600 = pneg %p447
        %p601 = pneg %p444
        %s602 = sand.u32 %s434, 1
        %s603 = scalar_lea.sflag [#allocation3], %s602
        %s604 = sand.u32 %s434, 1
        %s605 = smul.addr %s604, 8
        %s606 = scalar_lea.vmem [#allocation2], %s605
        %p607 = scmp.lt.s32.totalorder %s35, 1
        %s608 = scalar_select %p607, %s35, 1
        %p609 = scmp.lt.s32.totalorder %s36, 0
        %s610 = scalar_select %p609, %s36, 0
        %s611 = sadd.s32 %s610, %s608
        %s612 = smul.addr %s611, 8
        %s613 = scalar_lea.vmem %s0, %s612
        %p614 = scmp.lt.s32.totalorder %s35, 1
        %s615 = scalar_select %p614, %s35, 1
        %s616 = smul.addr %s615, 8
        %s617 = scalar_lea.vmem %s1, %s616
        %p618 = scmp.lt.s32.totalorder %s35, 1
        %s619 = scalar_select %p618, %s35, 1
        %p620 = scmp.lt.s32.totalorder %s36, 0
        %s621 = scalar_select %p620, %s36, 0
        %s622 = sadd.s32 %s621, %s619
        %s623 = smul.addr %s622, 8
        %s624 = scalar_lea.vmem %s2, %s623
        %p625 = scmp.lt.s32.totalorder %s35, 1
        %s626 = scalar_select %p625, %s35, 1
        %s627 = scalar_lea.vmem %s3, %s626
        %v629 = vld [vmem:[%s613] sm:$0xff]
        %v630 = vld [vmem:[%s617] sm:$0xff]
        %v631 = vld [vmem:[%s624] sm:$0xff]
        %v632 = vld [vmem:[%s627] sm:$0x1]
        %634 = vset.pattern.permute.xlu0 0
        %635 = vperm.xlu0 %634, %v631
        %v636 = vpop.permute.xlu0 %635
        %v639 = vlaneseq
        %v640 = vshrl.u32 %v639, 7
        %v641 = vsub.s32 0, %v640
        %v642 = vrot.slane %v632, %v641
        %v644 = vmul.f32 %v636, %v642
        %vm645 = vcmp.gt.f32.partialorder %v644, 0.0
        %v646 = vld [vmem:[%s4] sm:$0x1]
        %v647 = vld [vmem:[%s5] sm:$0x1]
        %vm648 = vcmask 261120
        %v649 = vsel %vm648, %v629, 0.0
        %650 = vadd.xlane.f32.xlu0 %v649
        %v651 = vpop.xlane.xlu0 %650
        %v652 = vrcp.pop 32.0
        %v653 = vmul.f32 %v651, %v652
        %v654 = vsub.f32 %v629, %v653
        %v655 = vmul.f32 %v654, %v654
        %v656 = vsel %vm648, %v655, 0.0
        %657 = vadd.xlane.f32.xlu0 %v656
        %v658 = vpop.xlane.xlu0 %657
        %v659 = vmul.f32 %v658, %v652
        %v660 = vadd.f32 %v659, 1e-05
        %v661 = vrsqrt.pop %v660
        %v662 = vmul.f32 %v654, %v661
        %v664 = vlaneseq
        %v665 = vshrl.u32 %v664, 7
        %v666 = vsub.s32 0, %v665
        %v667 = vrot.slane %v646, %v666
        %v669 = vmul.f32 %v662, %v667
        %v671 = vlaneseq
        %v672 = vshrl.u32 %v671, 7
        %v673 = vsub.s32 0, %v672
        %v674 = vrot.slane %v647, %v673
        %v676 = vadd.f32 %v669, %v674
        %v677 = vpack.c.bf16 %v630, %v630
        %v678 = vpack.c.bf16 %v676, %v676
        %v679 = vld [vmem:[%s6] sm:$0xf]
        %v680 = vld [vmem:[%s6 + $0x4] sm:$0xf]
        %v681 = vld [vmem:[%s6 + $0x8] sm:$0xf]
        %v682 = vld [vmem:[%s6 + $0xc] sm:$0xf]
        %v687 = vunpack.c.l.b16 %v679
        %v688 = vunpack.c.l.b16 %v680
        %v689 = vunpack.c.l.b16 %v681
        %v690 = vunpack.c.l.b16 %v682
        %v691 = vpack.c.b16 %v688, %v687
        %v692 = vpack.c.b16 %v690, %v689
        %v696 = vsel %vm648, %v678, 0
        %698 = vmatprep.subr.bf16.mxu0 0
        %699 = vmatpush1.bf16.msra.mxu0 0
        %700 = vmatprep.subr.bf16.mxu0 0
        %701 = vmatpush1.bf16.msra.mxu0 0
        %702 = vmatprep.subr.bf16.mxu0 0
        %703 = vmatpush1.bf16.msra.mxu0 0
        %704 = vmatprep.subr.bf16.mxu0 0
        %705 = vmatpush1.bf16.msra.mxu0 0
        %706 = vmatprep.subr.bf16.mxu0 0
        %707 = vmatpush1.bf16.msra.mxu0 0
        %708 = vmatprep.subr.bf16.mxu0 0
        %709 = vmatpush1.bf16.msra.mxu0 0
        %710 = vmatprep.subr.bf16.mxu0 0
        %711 = vmatpush1.bf16.msra.mxu0 %v692
        %712 = vmatprep.subr.bf16.mxu0 0
        %713 = vmatpush1.bf16.msra.mxu0 %v691
        %714 = vmatprep.subr.bf16.mxu0 0
        %715 = vmatpush2.bf16.msra.mxu0 0
        %716 = vmatprep.subr.bf16.mxu0 0
        %717 = vmatpush2.bf16.msra.mxu0 0
        %718 = vmatprep.subr.bf16.mxu0 0
        %719 = vmatpush2.bf16.msra.mxu0 0
        %720 = vmatprep.subr.bf16.mxu0 0
        %721 = vmatpush2.bf16.msra.mxu0 0
        %722 = vmatprep.subr.bf16.mxu0 0
        %723 = vmatpush2.bf16.msra.mxu0 0
        %724 = vmatprep.subr.bf16.mxu0 0
        %725 = vmatpush2.bf16.msra.mxu0 0
        %726 = vmatprep.subr.bf16.mxu0 0
        %727 = vmatpush2.bf16.msra.mxu0 0
        %728 = vmatprep.subr.bf16.mxu0 0
        %729 = vmatpush2.bf16.msra.mxu0 0
        %730 = vmatprep.mubr.bf16.mxu0 0
        %731 = vmatmul.mubr.bf16.gmra.mxu0 %v696
        %v732 = vpop.f32.mrf.mxu0
        %v733 = vadd.f32 0.0, %v732
        %v734 = vpop.f32.mrf.mxu0
        %v735 = vpop.f32.mrf.mxu0
        %v736 = vpop.f32.mrf.mxu0
        %737 = vdwg.mxu0
        %v738 = vld [vmem:[%s7] sm:$0xf]
        %v739 = vld [vmem:[%s7 + $0x4] sm:$0xf]
        %v742 = vunpack.c.l.b16 %v738
        %v743 = vunpack.c.l.b16 %v739
        %v744 = vpack.c.b16 %v743, %v742
        %vm746 = vcmask 130048
        %v748 = vsel %vm746, %v677, 0
        %750 = vmatprep.subr.bf16.mxu0 0
        %751 = vmatpush1.bf16.msra.mxu0 0
        %752 = vmatprep.subr.bf16.mxu0 0
        %753 = vmatpush1.bf16.msra.mxu0 0
        %754 = vmatprep.subr.bf16.mxu0 0
        %755 = vmatpush1.bf16.msra.mxu0 0
        %756 = vmatprep.subr.bf16.mxu0 0
        %757 = vmatpush1.bf16.msra.mxu0 0
        %758 = vmatprep.subr.bf16.mxu0 0
        %759 = vmatpush1.bf16.msra.mxu0 0
        %760 = vmatprep.subr.bf16.mxu0 0
        %761 = vmatpush1.bf16.msra.mxu0 0
        %762 = vmatprep.subr.bf16.mxu0 0
        %763 = vmatpush1.bf16.msra.mxu0 0
        %764 = vmatprep.subr.bf16.mxu0 0
        %765 = vmatpush1.bf16.msra.mxu0 %v744
        %766 = vmatprep.subr.bf16.mxu0 0
        %767 = vmatpush2.bf16.msra.mxu0 0
        %768 = vmatprep.subr.bf16.mxu0 0
        %769 = vmatpush2.bf16.msra.mxu0 0
        %770 = vmatprep.subr.bf16.mxu0 0
        %771 = vmatpush2.bf16.msra.mxu0 0
        %772 = vmatprep.subr.bf16.mxu0 0
        %773 = vmatpush2.bf16.msra.mxu0 0
        %774 = vmatprep.subr.bf16.mxu0 0
        %775 = vmatpush2.bf16.msra.mxu0 0
        %776 = vmatprep.subr.bf16.mxu0 0
        %777 = vmatpush2.bf16.msra.mxu0 0
        %778 = vmatprep.subr.bf16.mxu0 0
        %779 = vmatpush2.bf16.msra.mxu0 0
        %780 = vmatprep.subr.bf16.mxu0 0
        %781 = vmatpush2.bf16.msra.mxu0 0
        %782 = vmatprep.mubr.bf16.mxu0 0
        %783 = vmatmul.mubr.bf16.gmra.mxu0 %v748
        %v784 = vpop.f32.mrf.mxu0
        %v785 = vadd.f32 0.0, %v784
        %v786 = vpop.f32.mrf.mxu0
        %v787 = vpop.f32.mrf.mxu0
        %v788 = vpop.f32.mrf.mxu0
        %789 = vdwg.mxu0
        %v790 = vld [vmem:[%s8] sm:$0xf]
        %v791 = vld [vmem:[%s8 + $0x4] sm:$0xf]
        %v794 = vunpack.c.l.b16 %v790
        %v795 = vunpack.c.l.b16 %v791
        %v796 = vpack.c.b16 %v795, %v794
        %798 = vmatprep.subr.bf16.mxu0 0
        %799 = vmatpush1.bf16.msra.mxu0 0
        %800 = vmatprep.subr.bf16.mxu0 0
        %801 = vmatpush1.bf16.msra.mxu0 0
        %802 = vmatprep.subr.bf16.mxu0 0
        %803 = vmatpush1.bf16.msra.mxu0 0
        %804 = vmatprep.subr.bf16.mxu0 0
        %805 = vmatpush1.bf16.msra.mxu0 0
        %806 = vmatprep.subr.bf16.mxu0 0
        %807 = vmatpush1.bf16.msra.mxu0 0
        %808 = vmatprep.subr.bf16.mxu0 0
        %809 = vmatpush1.bf16.msra.mxu0 0
        %810 = vmatprep.subr.bf16.mxu0 0
        %811 = vmatpush1.bf16.msra.mxu0 0
        %812 = vmatprep.subr.bf16.mxu0 0
        %813 = vmatpush1.bf16.msra.mxu0 %v796
        %814 = vmatprep.subr.bf16.mxu0 0
        %815 = vmatpush2.bf16.msra.mxu0 0
        %816 = vmatprep.subr.bf16.mxu0 0
        %817 = vmatpush2.bf16.msra.mxu0 0
        %818 = vmatprep.subr.bf16.mxu0 0
        %819 = vmatpush2.bf16.msra.mxu0 0
        %820 = vmatprep.subr.bf16.mxu0 0
        %821 = vmatpush2.bf16.msra.mxu0 0
        %822 = vmatprep.subr.bf16.mxu0 0
        %823 = vmatpush2.bf16.msra.mxu0 0
        %824 = vmatprep.subr.bf16.mxu0 0
        %825 = vmatpush2.bf16.msra.mxu0 0
        %826 = vmatprep.subr.bf16.mxu0 0
        %827 = vmatpush2.bf16.msra.mxu0 0
        %828 = vmatprep.subr.bf16.mxu0 0
        %829 = vmatpush2.bf16.msra.mxu0 0
        %830 = vmatprep.mubr.bf16.mxu0 0
        %831 = vmatmul.mubr.bf16.gmra.mxu0 %v748
        %v832 = vpop.f32.mrf.mxu0
        %v833 = vadd.f32 0.0, %v832
        %v834 = vpop.f32.mrf.mxu0
        %v835 = vpop.f32.mrf.mxu0
        %v836 = vpop.f32.mrf.mxu0
        %837 = vdwg.mxu0
        %839 = vrot.lane.b32.xlu0 %v733, 120
        %v840 = vpop.permute.xlu0 %839
        %v842 = vcombine.high %v733, 0.0
        %v844 = vunpack.c.l.s4 1983009808
        %v845 = vunpack.c.0.s8 %v844
        %v846 = vlaneseq
        %v847 = vshrl.u32 %v846, 7
        %v848 = vsub.s32 %v845, %v847
        %v849 = vrot.slane %v733, %v848
        %v851 = vunpack.c.l.s4 1983009808
        %v852 = vunpack.c.0.s8 %v851
        %v853 = vlaneseq
        %v854 = vshrl.u32 %v853, 7
        %v855 = vsub.s32 %v852, %v854
        %v856 = vrot.slane %v842, %v855
        %v857 = vcombine.high %v840, 0.0
        %v859 = vunpack.c.l.s4 1983009808
        %v860 = vunpack.c.0.s8 %v859
        %v861 = vlaneseq
        %v862 = vshrl.u32 %v861, 7
        %v863 = vsub.s32 %v860, %v862
        %v864 = vrot.slane %v840, %v863
        %v866 = vunpack.c.l.s4 1983009808
        %v867 = vunpack.c.0.s8 %v866
        %v868 = vlaneseq
        %v869 = vshrl.u32 %v868, 7
        %v870 = vsub.s32 %v867, %v869
        %v871 = vrot.slane %v857, %v870
        %v872 = vcombine.low %v849, %v864
        %v873 = vcombine.high %v849, %v864
        %v875 = vunpack.c.l.s4 1934713408
        %v876 = vunpack.c.0.s8 %v875
        %v877 = vlaneseq
        %v878 = vshrl.u32 %v877, 7
        %v879 = vsub.s32 %v876, %v878
        %v880 = vrot.slane %v872, %v879
        %v882 = vunpack.c.l.s4 1934713408
        %v883 = vunpack.c.0.s8 %v882
        %v884 = vlaneseq
        %v885 = vshrl.u32 %v884, 7
        %v886 = vsub.s32 %v883, %v885
        %v887 = vrot.slane %v873, %v886
        %v888 = vcombine.low %v856, %v871
        %v889 = vcombine.high %v856, %v871
        %v891 = vunpack.c.l.s4 1934713408
        %v892 = vunpack.c.0.s8 %v891
        %v893 = vlaneseq
        %v894 = vshrl.u32 %v893, 7
        %v895 = vsub.s32 %v892, %v894
        %v896 = vrot.slane %v888, %v895
        %v898 = vunpack.c.l.s4 1934713408
        %v899 = vunpack.c.0.s8 %v898
        %v900 = vlaneseq
        %v901 = vshrl.u32 %v900, 7
        %v902 = vsub.s32 %v899, %v901
        %v903 = vrot.slane %v889, %v902
        %v904 = vcombine.high %v880, 0.0
        %v905 = vcombine.high %v887, 0.0
        %v906 = vcombine.high %v896, 0.0
        %v907 = vcombine.high %v903, 0.0
        %v908 = vcombine.low %v880, %v887
        %v910 = vunpack.c.l.s4 1983009808
        %v911 = vunpack.c.0.s8 %v910
        %v912 = vlaneseq
        %v913 = vshrl.u32 %v912, 7
        %v914 = vsub.s32 %v911, %v913
        %v915 = vrot.slane %v908, %v914
        %v916 = vcombine.low %v904, %v905
        %v918 = vunpack.c.l.s4 1983009808
        %v919 = vunpack.c.0.s8 %v918
        %v920 = vlaneseq
        %v921 = vshrl.u32 %v920, 7
        %v922 = vsub.s32 %v919, %v921
        %v923 = vrot.slane %v916, %v922
        %v924 = vcombine.low %v896, %v903
        %v926 = vunpack.c.l.s4 1983009808
        %v927 = vunpack.c.0.s8 %v926
        %v928 = vlaneseq
        %v929 = vshrl.u32 %v928, 7
        %v930 = vsub.s32 %v927, %v929
        %v931 = vrot.slane %v924, %v930
        %v932 = vcombine.low %v906, %v907
        %v934 = vunpack.c.l.s4 1983009808
        %v935 = vunpack.c.0.s8 %v934
        %v936 = vlaneseq
        %v937 = vshrl.u32 %v936, 7
        %v938 = vsub.s32 %v935, %v937
        %v939 = vrot.slane %v932, %v938
        %v940 = vcombine.low %v915, %v923
        %v942 = vunpack.c.l.s4 1934713408
        %v943 = vunpack.c.0.s8 %v942
        %v944 = vlaneseq
        %v945 = vshrl.u32 %v944, 7
        %v946 = vsub.s32 %v943, %v945
        %v947 = vrot.slane %v940, %v946
        %v948 = vcombine.low %v931, %v939
        %v950 = vunpack.c.l.s4 1934713408
        %v951 = vunpack.c.0.s8 %v950
        %v952 = vlaneseq
        %v953 = vshrl.u32 %v952, 7
        %v954 = vsub.s32 %v951, %v953
        %v955 = vrot.slane %v948, %v954
        %v956 = vcombine.low %v947, %v955
        %v957 = vcombine.high %v947, %v955
        %v958 = vpack.c.bf16 %v956, %v956
        %v959 = vpack.c.bf16 %v957, %v957
        %961 = vrot.lane.b32.xlu0 %v785, 120
        %v962 = vpop.permute.xlu0 %961
        %v964 = vcombine.high %v785, 0.0
        %v966 = vunpack.c.l.s4 1983009808
        %v967 = vunpack.c.0.s8 %v966
        %v968 = vlaneseq
        %v969 = vshrl.u32 %v968, 7
        %v970 = vsub.s32 %v967, %v969
        %v971 = vrot.slane %v785, %v970
        %v973 = vunpack.c.l.s4 1983009808
        %v974 = vunpack.c.0.s8 %v973
        %v975 = vlaneseq
        %v976 = vshrl.u32 %v975, 7
        %v977 = vsub.s32 %v974, %v976
        %v978 = vrot.slane %v964, %v977
        %v979 = vcombine.high %v962, 0.0
        %v981 = vunpack.c.l.s4 1983009808
        %v982 = vunpack.c.0.s8 %v981
        %v983 = vlaneseq
        %v984 = vshrl.u32 %v983, 7
        %v985 = vsub.s32 %v982, %v984
        %v986 = vrot.slane %v962, %v985
        %v988 = vunpack.c.l.s4 1983009808
        %v989 = vunpack.c.0.s8 %v988
        %v990 = vlaneseq
        %v991 = vshrl.u32 %v990, 7
        %v992 = vsub.s32 %v989, %v991
        %v993 = vrot.slane %v979, %v992
        %v994 = vcombine.low %v971, %v986
        %v995 = vcombine.high %v971, %v986
        %v997 = vunpack.c.l.s4 1934713408
        %v998 = vunpack.c.0.s8 %v997
        %v999 = vlaneseq
        %v1000 = vshrl.u32 %v999, 7
        %v1001 = vsub.s32 %v998, %v1000
        %v1002 = vrot.slane %v994, %v1001
        %v1004 = vunpack.c.l.s4 1934713408
        %v1005 = vunpack.c.0.s8 %v1004
        %v1006 = vlaneseq
        %v1007 = vshrl.u32 %v1006, 7
        %v1008 = vsub.s32 %v1005, %v1007
        %v1009 = vrot.slane %v995, %v1008
        %v1010 = vcombine.low %v978, %v993
        %v1011 = vcombine.high %v978, %v993
        %v1013 = vunpack.c.l.s4 1934713408
        %v1014 = vunpack.c.0.s8 %v1013
        %v1015 = vlaneseq
        %v1016 = vshrl.u32 %v1015, 7
        %v1017 = vsub.s32 %v1014, %v1016
        %v1018 = vrot.slane %v1010, %v1017
        %v1020 = vunpack.c.l.s4 1934713408
        %v1021 = vunpack.c.0.s8 %v1020
        %v1022 = vlaneseq
        %v1023 = vshrl.u32 %v1022, 7
        %v1024 = vsub.s32 %v1021, %v1023
        %v1025 = vrot.slane %v1011, %v1024
        %v1026 = vcombine.high %v1002, 0.0
        %v1027 = vcombine.high %v1009, 0.0
        %v1028 = vcombine.high %v1018, 0.0
        %v1029 = vcombine.high %v1025, 0.0
        %v1030 = vcombine.low %v1002, %v1009
        %v1032 = vunpack.c.l.s4 1983009808
        %v1033 = vunpack.c.0.s8 %v1032
        %v1034 = vlaneseq
        %v1035 = vshrl.u32 %v1034, 7
        %v1036 = vsub.s32 %v1033, %v1035
        %v1037 = vrot.slane %v1030, %v1036
        %v1038 = vcombine.low %v1026, %v1027
        %v1040 = vunpack.c.l.s4 1983009808
        %v1041 = vunpack.c.0.s8 %v1040
        %v1042 = vlaneseq
        %v1043 = vshrl.u32 %v1042, 7
        %v1044 = vsub.s32 %v1041, %v1043
        %v1045 = vrot.slane %v1038, %v1044
        %v1046 = vcombine.low %v1018, %v1025
        %v1048 = vunpack.c.l.s4 1983009808
        %v1049 = vunpack.c.0.s8 %v1048
        %v1050 = vlaneseq
        %v1051 = vshrl.u32 %v1050, 7
        %v1052 = vsub.s32 %v1049, %v1051
        %v1053 = vrot.slane %v1046, %v1052
        %v1054 = vcombine.low %v1028, %v1029
        %v1056 = vunpack.c.l.s4 1983009808
        %v1057 = vunpack.c.0.s8 %v1056
        %v1058 = vlaneseq
        %v1059 = vshrl.u32 %v1058, 7
        %v1060 = vsub.s32 %v1057, %v1059
        %v1061 = vrot.slane %v1054, %v1060
        %v1062 = vcombine.low %v1037, %v1045
        %v1064 = vunpack.c.l.s4 1934713408
        %v1065 = vunpack.c.0.s8 %v1064
        %v1066 = vlaneseq
        %v1067 = vshrl.u32 %v1066, 7
        %v1068 = vsub.s32 %v1065, %v1067
        %v1069 = vrot.slane %v1062, %v1068
        %v1070 = vcombine.low %v1053, %v1061
        %v1072 = vunpack.c.l.s4 1934713408
        %v1073 = vunpack.c.0.s8 %v1072
        %v1074 = vlaneseq
        %v1075 = vshrl.u32 %v1074, 7
        %v1076 = vsub.s32 %v1073, %v1075
        %v1077 = vrot.slane %v1070, %v1076
        %v1078 = vcombine.low %v1069, %v1077
        %v1079 = vcombine.high %v1069, %v1077
        %v1080 = vpack.c.bf16 %v1078, %v1078
        %v1081 = vpack.c.bf16 %v1079, %v1079
        %1083 = vrot.lane.b32.xlu0 %v833, 120
        %v1084 = vpop.permute.xlu0 %1083
        %v1086 = vcombine.high %v833, 0.0
        %v1088 = vunpack.c.l.s4 1983009808
        %v1089 = vunpack.c.0.s8 %v1088
        %v1090 = vlaneseq
        %v1091 = vshrl.u32 %v1090, 7
        %v1092 = vsub.s32 %v1089, %v1091
        %v1093 = vrot.slane %v833, %v1092
        %v1095 = vunpack.c.l.s4 1983009808
        %v1096 = vunpack.c.0.s8 %v1095
        %v1097 = vlaneseq
        %v1098 = vshrl.u32 %v1097, 7
        %v1099 = vsub.s32 %v1096, %v1098
        %v1100 = vrot.slane %v1086, %v1099
        %v1101 = vcombine.high %v1084, 0.0
        %v1103 = vunpack.c.l.s4 1983009808
        %v1104 = vunpack.c.0.s8 %v1103
        %v1105 = vlaneseq
        %v1106 = vshrl.u32 %v1105, 7
        %v1107 = vsub.s32 %v1104, %v1106
        %v1108 = vrot.slane %v1084, %v1107
        %v1110 = vunpack.c.l.s4 1983009808
        %v1111 = vunpack.c.0.s8 %v1110
        %v1112 = vlaneseq
        %v1113 = vshrl.u32 %v1112, 7
        %v1114 = vsub.s32 %v1111, %v1113
        %v1115 = vrot.slane %v1101, %v1114
        %v1116 = vcombine.low %v1093, %v1108
        %v1117 = vcombine.high %v1093, %v1108
        %v1119 = vunpack.c.l.s4 1934713408
        %v1120 = vunpack.c.0.s8 %v1119
        %v1121 = vlaneseq
        %v1122 = vshrl.u32 %v1121, 7
        %v1123 = vsub.s32 %v1120, %v1122
        %v1124 = vrot.slane %v1116, %v1123
        %v1126 = vunpack.c.l.s4 1934713408
        %v1127 = vunpack.c.0.s8 %v1126
        %v1128 = vlaneseq
        %v1129 = vshrl.u32 %v1128, 7
        %v1130 = vsub.s32 %v1127, %v1129
        %v1131 = vrot.slane %v1117, %v1130
        %v1132 = vcombine.low %v1100, %v1115
        %v1133 = vcombine.high %v1100, %v1115
        %v1135 = vunpack.c.l.s4 1934713408
        %v1136 = vunpack.c.0.s8 %v1135
        %v1137 = vlaneseq
        %v1138 = vshrl.u32 %v1137, 7
        %v1139 = vsub.s32 %v1136, %v1138
        %v1140 = vrot.slane %v1132, %v1139
        %v1142 = vunpack.c.l.s4 1934713408
        %v1143 = vunpack.c.0.s8 %v1142
        %v1144 = vlaneseq
        %v1145 = vshrl.u32 %v1144, 7
        %v1146 = vsub.s32 %v1143, %v1145
        %v1147 = vrot.slane %v1133, %v1146
        %v1148 = vcombine.high %v1124, 0.0
        %v1149 = vcombine.high %v1131, 0.0
        %v1150 = vcombine.high %v1140, 0.0
        %v1151 = vcombine.high %v1147, 0.0
        %v1152 = vcombine.low %v1124, %v1131
        %v1154 = vunpack.c.l.s4 1983009808
        %v1155 = vunpack.c.0.s8 %v1154
        %v1156 = vlaneseq
        %v1157 = vshrl.u32 %v1156, 7
        %v1158 = vsub.s32 %v1155, %v1157
        %v1159 = vrot.slane %v1152, %v1158
        %v1160 = vcombine.low %v1148, %v1149
        %v1162 = vunpack.c.l.s4 1983009808
        %v1163 = vunpack.c.0.s8 %v1162
        %v1164 = vlaneseq
        %v1165 = vshrl.u32 %v1164, 7
        %v1166 = vsub.s32 %v1163, %v1165
        %v1167 = vrot.slane %v1160, %v1166
        %v1168 = vcombine.low %v1140, %v1147
        %v1170 = vunpack.c.l.s4 1983009808
        %v1171 = vunpack.c.0.s8 %v1170
        %v1172 = vlaneseq
        %v1173 = vshrl.u32 %v1172, 7
        %v1174 = vsub.s32 %v1171, %v1173
        %v1175 = vrot.slane %v1168, %v1174
        %v1176 = vcombine.low %v1150, %v1151
        %v1178 = vunpack.c.l.s4 1983009808
        %v1179 = vunpack.c.0.s8 %v1178
        %v1180 = vlaneseq
        %v1181 = vshrl.u32 %v1180, 7
        %v1182 = vsub.s32 %v1179, %v1181
        %v1183 = vrot.slane %v1176, %v1182
        %v1184 = vcombine.low %v1159, %v1167
        %v1186 = vunpack.c.l.s4 1934713408
        %v1187 = vunpack.c.0.s8 %v1186
        %v1188 = vlaneseq
        %v1189 = vshrl.u32 %v1188, 7
        %v1190 = vsub.s32 %v1187, %v1189
        %v1191 = vrot.slane %v1184, %v1190
        %v1192 = vcombine.low %v1175, %v1183
        %v1194 = vunpack.c.l.s4 1934713408
        %v1195 = vunpack.c.0.s8 %v1194
        %v1196 = vlaneseq
        %v1197 = vshrl.u32 %v1196, 7
        %v1198 = vsub.s32 %v1195, %v1197
        %v1199 = vrot.slane %v1192, %v1198
        %v1200 = vcombine.low %v1191, %v1199
        %v1201 = vcombine.high %v1191, %v1199
        %v1202 = vpack.c.bf16 %v1200, %v1200
        %v1203 = vpack.c.bf16 %v1201, %v1201
        %vm1204 = vcmask 64512
        %v1206 = vsel %vm1204, %v958, 0
        %v1209 = vsel %vm1204, %v1080, 0
        %1211 = vmatprep.subr.bf16.mxu0 0
        %1212 = vmatpush1.bf16.xpose.msra.mxu0 0
        %1213 = vmatprep.subr.bf16.mxu0 0
        %1214 = vmatpush1.bf16.xpose.msra.mxu0 0
        %1215 = vmatprep.subr.bf16.mxu0 0
        %1216 = vmatpush1.bf16.xpose.msra.mxu0 0
        %1217 = vmatprep.subr.bf16.mxu0 0
        %1218 = vmatpush1.bf16.xpose.msra.mxu0 0
        %1219 = vmatprep.subr.bf16.mxu0 0
        %1220 = vmatpush1.bf16.xpose.msra.mxu0 0
        %1221 = vmatprep.subr.bf16.mxu0 0
        %1222 = vmatpush1.bf16.xpose.msra.mxu0 0
        %1223 = vmatprep.subr.bf16.mxu0 0
        %1224 = vmatpush1.bf16.xpose.msra.mxu0 0
        %1225 = vmatprep.subr.bf16.mxu0 0
        %1226 = vmatpush1.bf16.xpose.msra.mxu0 %v1209
        %1227 = vmatprep.subr.bf16.mxu0 0
        %1228 = vmatpush2.bf16.xpose.msra.mxu0 0
        %1229 = vmatprep.subr.bf16.mxu0 0
        %1230 = vmatpush2.bf16.xpose.msra.mxu0 0
        %1231 = vmatprep.subr.bf16.mxu0 0
        %1232 = vmatpush2.bf16.xpose.msra.mxu0 0
        %1233 = vmatprep.subr.bf16.mxu0 0
        %1234 = vmatpush2.bf16.xpose.msra.mxu0 0
        %1235 = vmatprep.subr.bf16.mxu0 0
        %1236 = vmatpush2.bf16.xpose.msra.mxu0 0
        %1237 = vmatprep.subr.bf16.mxu0 0
        %1238 = vmatpush2.bf16.xpose.msra.mxu0 0
        %1239 = vmatprep.subr.bf16.mxu0 0
        %1240 = vmatpush2.bf16.xpose.msra.mxu0 0
        %1241 = vmatprep.subr.bf16.mxu0 0
        %1242 = vmatpush2.bf16.xpose.msra.mxu0 0
        %1243 = vmatprep.mubr.bf16.mxu0 0
        %1244 = vmatmul.mubr.bf16.gmra.mxu0 %v1206
        %v1245 = vpop.f32.mrf.mxu0
        %v1246 = vadd.f32 0.0, %v1245
        %v1247 = vpop.f32.mrf.mxu0
        %v1248 = vpop.f32.mrf.mxu0
        %v1249 = vpop.f32.mrf.mxu0
        %1250 = vdwg.mxu0
        %v1252 = vsel %vm1204, %v959, 0
        %v1255 = vsel %vm1204, %v1081, 0
        %1257 = vmatprep.subr.bf16.mxu0 0
        %1258 = vmatpush1.bf16.xpose.msra.mxu0 0
        %1259 = vmatprep.subr.bf16.mxu0 0
        %1260 = vmatpush1.bf16.xpose.msra.mxu0 0
        %1261 = vmatprep.subr.bf16.mxu0 0
        %1262 = vmatpush1.bf16.xpose.msra.mxu0 0
        %1263 = vmatprep.subr.bf16.mxu0 0
        %1264 = vmatpush1.bf16.xpose.msra.mxu0 0
        %1265 = vmatprep.subr.bf16.mxu0 0
        %1266 = vmatpush1.bf16.xpose.msra.mxu0 0
        %1267 = vmatprep.subr.bf16.mxu0 0
        %1268 = vmatpush1.bf16.xpose.msra.mxu0 0
        %1269 = vmatprep.subr.bf16.mxu0 0
        %1270 = vmatpush1.bf16.xpose.msra.mxu0 0
        %1271 = vmatprep.subr.bf16.mxu0 0
        %1272 = vmatpush1.bf16.xpose.msra.mxu0 %v1255
        %1273 = vmatprep.subr.bf16.mxu0 0
        %1274 = vmatpush2.bf16.xpose.msra.mxu0 0
        %1275 = vmatprep.subr.bf16.mxu0 0
        %1276 = vmatpush2.bf16.xpose.msra.mxu0 0
        %1277 = vmatprep.subr.bf16.mxu0 0
        %1278 = vmatpush2.bf16.xpose.msra.mxu0 0
        %1279 = vmatprep.subr.bf16.mxu0 0
        %1280 = vmatpush2.bf16.xpose.msra.mxu0 0
        %1281 = vmatprep.subr.bf16.mxu0 0
        %1282 = vmatpush2.bf16.xpose.msra.mxu0 0
        %1283 = vmatprep.subr.bf16.mxu0 0
        %1284 = vmatpush2.bf16.xpose.msra.mxu0 0
        %1285 = vmatprep.subr.bf16.mxu0 0
        %1286 = vmatpush2.bf16.xpose.msra.mxu0 0
        %1287 = vmatprep.subr.bf16.mxu0 0
        %1288 = vmatpush2.bf16.xpose.msra.mxu0 0
        %1289 = vmatprep.mubr.bf16.mxu0 0
        %1290 = vmatmul.mubr.bf16.gmra.mxu0 %v1252
        %v1291 = vpop.f32.mrf.mxu0
        %v1292 = vadd.f32 0.0, %v1291
        %v1293 = vpop.f32.mrf.mxu0
        %v1294 = vpop.f32.mrf.mxu0
        %v1295 = vpop.f32.mrf.mxu0
        %1296 = vdwg.mxu0
        %v1297 = vsel %vm645, 1, 0
        %vm1298 = vcmp.eq.s32.totalorder %v1297, 1
        %v1299 = vsel %vm1298, %v1246, -3.4028235e+38
        %v1300 = vsel %vm1298, %v1292, -3.4028235e+38
        %v1301 = vsel %vm1204, %v1299, -inf
        %1302 = vmax.xlane.f32.xlu0 %v1301
        %v1303 = vpop.xlane.xlu0 %1302
        %v1304 = vsel %vm1204, %v1300, -inf
        %1305 = vmax.xlane.f32.xlu0 %v1304
        %v1306 = vpop.xlane.xlu0 %1305
        %v1307 = vsub.f32 %v1299, %v1303
        %v1308 = vsub.f32 %v1300, %v1306
        %v1309 = vmul.f32 %v1307, 1.442695
        %v1310 = vpow.pop %v1309
        %v1311 = vmul.f32 %v1308, 1.442695
        %v1312 = vpow.pop %v1311
        %v1313 = vsel %vm1204, %v1310, 0.0
        %1314 = vadd.xlane.f32.xlu0 %v1313
        %v1315 = vpop.xlane.xlu0 %1314
        %v1316 = vsel %vm1204, %v1312, 0.0
        %1317 = vadd.xlane.f32.xlu0 %v1316
        %v1318 = vpop.xlane.xlu0 %1317
        %v1319 = vrcp.pop %v1315
        %v1320 = vrcp.pop %v1318
        %v1321 = vmul.f32 %v1310, %v1319
        %v1322 = vmul.f32 %v1312, %v1320
        %v1323 = vpack.c.bf16 %v1321, %v1321
        %v1324 = vpack.c.bf16 %v1322, %v1322
        %v1326 = vsel %vm1204, %v1323, 0
        %vm1328 = vcmask 1043456
        %v1330 = vsel %vm1328, %v1202, 0
        %1332 = vmatprep.subr.bf16.mxu0 0
        %1333 = vmatpush1.bf16.msra.mxu0 0
        %1334 = vmatprep.subr.bf16.mxu0 0
        %1335 = vmatpush1.bf16.msra.mxu0 0
        %1336 = vmatprep.subr.bf16.mxu0 0
        %1337 = vmatpush1.bf16.msra.mxu0 0
        %1338 = vmatprep.subr.bf16.mxu0 0
        %1339 = vmatpush1.bf16.msra.mxu0 0
        %1340 = vmatprep.subr.bf16.mxu0 0
        %1341 = vmatpush1.bf16.msra.mxu0 0
        %1342 = vmatprep.subr.bf16.mxu0 0
        %1343 = vmatpush1.bf16.msra.mxu0 0
        %1344 = vmatprep.subr.bf16.mxu0 0
        %1345 = vmatpush1.bf16.msra.mxu0 0
        %1346 = vmatprep.subr.bf16.mxu0 0
        %1347 = vmatpush1.bf16.msra.mxu0 %v1330
        %1348 = vmatprep.subr.bf16.mxu0 0
        %1349 = vmatpush2.bf16.msra.mxu0 0
        %1350 = vmatprep.subr.bf16.mxu0 0
        %1351 = vmatpush2.bf16.msra.mxu0 0
        %1352 = vmatprep.subr.bf16.mxu0 0
        %1353 = vmatpush2.bf16.msra.mxu0 0
        %1354 = vmatprep.subr.bf16.mxu0 0
        %1355 = vmatpush2.bf16.msra.mxu0 0
        %1356 = vmatprep.subr.bf16.mxu0 0
        %1357 = vmatpush2.bf16.msra.mxu0 0
        %1358 = vmatprep.subr.bf16.mxu0 0
        %1359 = vmatpush2.bf16.msra.mxu0 0
        %1360 = vmatprep.subr.bf16.mxu0 0
        %1361 = vmatpush2.bf16.msra.mxu0 0
        %1362 = vmatprep.subr.bf16.mxu0 0
        %1363 = vmatpush2.bf16.msra.mxu0 0
        %1364 = vmatprep.mubr.bf16.mxu0 0
        %1365 = vmatmul.mubr.bf16.gmra.mxu0 %v1326
        %v1366 = vpop.f32.mrf.mxu0
        %v1367 = vadd.f32 0.0, %v1366
        %v1368 = vpop.f32.mrf.mxu0
        %v1369 = vpop.f32.mrf.mxu0
        %v1370 = vpop.f32.mrf.mxu0
        %1371 = vdwg.mxu0
        %v1373 = vsel %vm1204, %v1324, 0
        %v1376 = vsel %vm1328, %v1203, 0
        %1378 = vmatprep.subr.bf16.mxu0 0
        %1379 = vmatpush1.bf16.msra.mxu0 0
        %1380 = vmatprep.subr.bf16.mxu0 0
        %1381 = vmatpush1.bf16.msra.mxu0 0
        %1382 = vmatprep.subr.bf16.mxu0 0
        %1383 = vmatpush1.bf16.msra.mxu0 0
        %1384 = vmatprep.subr.bf16.mxu0 0
        %1385 = vmatpush1.bf16.msra.mxu0 0
        %1386 = vmatprep.subr.bf16.mxu0 0
        %1387 = vmatpush1.bf16.msra.mxu0 0
        %1388 = vmatprep.subr.bf16.mxu0 0
        %1389 = vmatpush1.bf16.msra.mxu0 0
        %1390 = vmatprep.subr.bf16.mxu0 0
        %1391 = vmatpush1.bf16.msra.mxu0 0
        %1392 = vmatprep.subr.bf16.mxu0 0
        %1393 = vmatpush1.bf16.msra.mxu0 %v1376
        %1394 = vmatprep.subr.bf16.mxu0 0
        %1395 = vmatpush2.bf16.msra.mxu0 0
        %1396 = vmatprep.subr.bf16.mxu0 0
        %1397 = vmatpush2.bf16.msra.mxu0 0
        %1398 = vmatprep.subr.bf16.mxu0 0
        %1399 = vmatpush2.bf16.msra.mxu0 0
        %1400 = vmatprep.subr.bf16.mxu0 0
        %1401 = vmatpush2.bf16.msra.mxu0 0
        %1402 = vmatprep.subr.bf16.mxu0 0
        %1403 = vmatpush2.bf16.msra.mxu0 0
        %1404 = vmatprep.subr.bf16.mxu0 0
        %1405 = vmatpush2.bf16.msra.mxu0 0
        %1406 = vmatprep.subr.bf16.mxu0 0
        %1407 = vmatpush2.bf16.msra.mxu0 0
        %1408 = vmatprep.subr.bf16.mxu0 0
        %1409 = vmatpush2.bf16.msra.mxu0 0
        %1410 = vmatprep.mubr.bf16.mxu0 0
        %1411 = vmatmul.mubr.bf16.gmra.mxu0 %v1373
        %v1412 = vpop.f32.mrf.mxu0
        %v1413 = vadd.f32 0.0, %v1412
        %v1414 = vpop.f32.mrf.mxu0
        %v1415 = vpop.f32.mrf.mxu0
        %v1416 = vpop.f32.mrf.mxu0
        %1417 = vdwg.mxu0
        %v1418 = vcombine.high %v1367, 0.0
        %v1420 = vunpack.c.l.s4 1983009808
        %v1421 = vunpack.c.0.s8 %v1420
        %v1422 = vlaneseq
        %v1423 = vshrl.u32 %v1422, 7
        %v1424 = vsub.s32 %v1421, %v1423
        %v1425 = vrot.slane %v1367, %v1424
        %v1427 = vunpack.c.l.s4 1983009808
        %v1428 = vunpack.c.0.s8 %v1427
        %v1429 = vlaneseq
        %v1430 = vshrl.u32 %v1429, 7
        %v1431 = vsub.s32 %v1428, %v1430
        %v1432 = vrot.slane %v1418, %v1431
        %v1433 = vcombine.high %v1413, 0.0
        %v1435 = vunpack.c.l.s4 1983009808
        %v1436 = vunpack.c.0.s8 %v1435
        %v1437 = vlaneseq
        %v1438 = vshrl.u32 %v1437, 7
        %v1439 = vsub.s32 %v1436, %v1438
        %v1440 = vrot.slane %v1413, %v1439
        %v1442 = vunpack.c.l.s4 1983009808
        %v1443 = vunpack.c.0.s8 %v1442
        %v1444 = vlaneseq
        %v1445 = vshrl.u32 %v1444, 7
        %v1446 = vsub.s32 %v1443, %v1445
        %v1447 = vrot.slane %v1433, %v1446
        %v1448 = vcombine.low %v1425, %v1440
        %v1449 = vcombine.high %v1425, %v1440
        %v1451 = vunpack.c.l.s4 1934713408
        %v1452 = vunpack.c.0.s8 %v1451
        %v1453 = vlaneseq
        %v1454 = vshrl.u32 %v1453, 7
        %v1455 = vsub.s32 %v1452, %v1454
        %v1456 = vrot.slane %v1448, %v1455
        %v1458 = vunpack.c.l.s4 1934713408
        %v1459 = vunpack.c.0.s8 %v1458
        %v1460 = vlaneseq
        %v1461 = vshrl.u32 %v1460, 7
        %v1462 = vsub.s32 %v1459, %v1461
        %v1463 = vrot.slane %v1449, %v1462
        %v1464 = vcombine.low %v1432, %v1447
        %v1465 = vcombine.high %v1432, %v1447
        %v1467 = vunpack.c.l.s4 1934713408
        %v1468 = vunpack.c.0.s8 %v1467
        %v1469 = vlaneseq
        %v1470 = vshrl.u32 %v1469, 7
        %v1471 = vsub.s32 %v1468, %v1470
        %v1472 = vrot.slane %v1464, %v1471
        %v1474 = vunpack.c.l.s4 1934713408
        %v1475 = vunpack.c.0.s8 %v1474
        %v1476 = vlaneseq
        %v1477 = vshrl.u32 %v1476, 7
        %v1478 = vsub.s32 %v1475, %v1477
        %v1479 = vrot.slane %v1465, %v1478
        %v1480 = vcombine.high %v1456, 0.0
        %v1481 = vcombine.high %v1463, 0.0
        %v1482 = vcombine.high %v1472, 0.0
        %v1483 = vcombine.high %v1479, 0.0
        %v1484 = vcombine.low %v1456, %v1463
        %v1486 = vunpack.c.l.s4 1983009808
        %v1487 = vunpack.c.0.s8 %v1486
        %v1488 = vlaneseq
        %v1489 = vshrl.u32 %v1488, 7
        %v1490 = vsub.s32 %v1487, %v1489
        %v1491 = vrot.slane %v1484, %v1490
        %v1492 = vcombine.low %v1480, %v1481
        %v1494 = vunpack.c.l.s4 1983009808
        %v1495 = vunpack.c.0.s8 %v1494
        %v1496 = vlaneseq
        %v1497 = vshrl.u32 %v1496, 7
        %v1498 = vsub.s32 %v1495, %v1497
        %v1499 = vrot.slane %v1492, %v1498
        %v1500 = vcombine.low %v1472, %v1479
        %v1502 = vunpack.c.l.s4 1983009808
        %v1503 = vunpack.c.0.s8 %v1502
        %v1504 = vlaneseq
        %v1505 = vshrl.u32 %v1504, 7
        %v1506 = vsub.s32 %v1503, %v1505
        %v1507 = vrot.slane %v1500, %v1506
        %v1508 = vcombine.low %v1482, %v1483
        %v1510 = vunpack.c.l.s4 1983009808
        %v1511 = vunpack.c.0.s8 %v1510
        %v1512 = vlaneseq
        %v1513 = vshrl.u32 %v1512, 7
        %v1514 = vsub.s32 %v1511, %v1513
        %v1515 = vrot.slane %v1508, %v1514
        %v1516 = vcombine.low %v1491, %v1499
        %v1518 = vunpack.c.l.s4 1934713408
        %v1519 = vunpack.c.0.s8 %v1518
        %v1520 = vlaneseq
        %v1521 = vshrl.u32 %v1520, 7
        %v1522 = vsub.s32 %v1519, %v1521
        %v1523 = vrot.slane %v1516, %v1522
        %v1524 = vcombine.low %v1507, %v1515
        %v1526 = vunpack.c.l.s4 1934713408
        %v1527 = vunpack.c.0.s8 %v1526
        %v1528 = vlaneseq
        %v1529 = vshrl.u32 %v1528, 7
        %v1530 = vsub.s32 %v1527, %v1529
        %v1531 = vrot.slane %v1524, %v1530
        %v1532 = vcombine.low %v1523, %v1531
        %v1533 = vcombine.high %v1523, %v1531
        %1535 = vrot.lane.b32.xlu0 %v1533, 8
        %v1536 = vpop.permute.xlu0 %1535
        %v1538 = vsel %vm1204, %v1532, %v1536
        %v1539 = vpack.c.bf16 %v1538, %v1538
        %v1540 = vld [vmem:[%s9] sm:$0xf]
        %v1541 = vld [vmem:[%s9 + $0x4] sm:$0xf]
        %v1542 = vld [vmem:[%s10] sm:$0x1]
        %v1544 = vlaneseq
        %v1545 = vshrl.u32 %v1544, 7
        %v1546 = vsub.s32 0, %v1545
        %v1547 = vrot.slane %v1542, %v1546
        %v1551 = vunpack.c.l.b16 %v1540
        %v1552 = vunpack.c.l.b16 %v1541
        %v1553 = vpack.c.b16 %v1552, %v1551
        %v1556 = vsel %vm746, %v1539, 0
        %1558 = vmatprep.subr.bf16.mxu0 0
        %1559 = vmatpush1.bf16.msra.mxu0 0
        %1560 = vmatprep.subr.bf16.mxu0 0
        %1561 = vmatpush1.bf16.msra.mxu0 0
        %1562 = vmatprep.subr.bf16.mxu0 0
        %1563 = vmatpush1.bf16.msra.mxu0 0
        %1564 = vmatprep.subr.bf16.mxu0 0
        %1565 = vmatpush1.bf16.msra.mxu0 0
        %1566 = vmatprep.subr.bf16.mxu0 0
        %1567 = vmatpush1.bf16.msra.mxu0 0
        %1568 = vmatprep.subr.bf16.mxu0 0
        %1569 = vmatpush1.bf16.msra.mxu0 0
        %1570 = vmatprep.subr.bf16.mxu0 0
        %1571 = vmatpush1.bf16.msra.mxu0 0
        %1572 = vmatprep.subr.bf16.mxu0 0
        %1573 = vmatpush1.bf16.msra.mxu0 %v1553
        %1574 = vmatprep.subr.bf16.mxu0 0
        %1575 = vmatpush2.bf16.msra.mxu0 0
        %1576 = vmatprep.subr.bf16.mxu0 0
        %1577 = vmatpush2.bf16.msra.mxu0 0
        %1578 = vmatprep.subr.bf16.mxu0 0
        %1579 = vmatpush2.bf16.msra.mxu0 0
        %1580 = vmatprep.subr.bf16.mxu0 0
        %1581 = vmatpush2.bf16.msra.mxu0 0
        %1582 = vmatprep.subr.bf16.mxu0 0
        %1583 = vmatpush2.bf16.msra.mxu0 0
        %1584 = vmatprep.subr.bf16.mxu0 0
        %1585 = vmatpush2.bf16.msra.mxu0 0
        %1586 = vmatprep.subr.bf16.mxu0 0
        %1587 = vmatpush2.bf16.msra.mxu0 0
        %1588 = vmatprep.subr.bf16.mxu0 0
        %1589 = vmatpush2.bf16.msra.mxu0 0
        %1590 = vmatprep.mubr.bf16.mxu0 0
        %1591 = vmatmul.mubr.bf16.gmra.mxu0 %v1556
        %v1592 = vpop.f32.mrf.mxu0
        %v1593 = vadd.f32 %v1547, %v1592
        %v1594 = vpop.f32.mrf.mxu0
        %v1595 = vpop.f32.mrf.mxu0
        %v1596 = vpop.f32.mrf.mxu0
        %1597 = vdwg.mxu0
        %v1598 = vadd.f32 %v629, %v1593
        %v1599 = vld [vmem:[%s11] sm:$0x1]
        %v1600 = vld [vmem:[%s12] sm:$0x1]
        %v1601 = vsel %vm648, %v1598, 0.0
        %1602 = vadd.xlane.f32.xlu0 %v1601
        %v1603 = vpop.xlane.xlu0 %1602
        %v1604 = vmul.f32 %v1603, %v652
        %v1605 = vsub.f32 %v1598, %v1604
        %v1606 = vmul.f32 %v1605, %v1605
        %v1607 = vsel %vm648, %v1606, 0.0
        %1608 = vadd.xlane.f32.xlu0 %v1607
        %v1609 = vpop.xlane.xlu0 %1608
        %v1610 = vmul.f32 %v1609, %v652
        %v1611 = vadd.f32 %v1610, 1e-05
        %v1612 = vrsqrt.pop %v1611
        %v1613 = vmul.f32 %v1605, %v1612
        %v1615 = vlaneseq
        %v1616 = vshrl.u32 %v1615, 7
        %v1617 = vsub.s32 0, %v1616
        %v1618 = vrot.slane %v1599, %v1617
        %v1620 = vmul.f32 %v1613, %v1618
        %v1622 = vlaneseq
        %v1623 = vshrl.u32 %v1622, 7
        %v1624 = vsub.s32 0, %v1623
        %v1625 = vrot.slane %v1600, %v1624
        %v1627 = vadd.f32 %v1620, %v1625
        %v1628 = vpack.c.bf16 %v1627, %v1627
        %v1629 = vld [vmem:[%s13] sm:$0xf]
        %v1630 = vld [vmem:[%s13 + $0x4] sm:$0xf]
        %v1631 = vld [vmem:[%s13 + $0x8] sm:$0xf]
        %v1632 = vld [vmem:[%s13 + $0xc] sm:$0xf]
        %v1633 = vld [vmem:[%s14] sm:$0x1]
        %v1635 = vlaneseq
        %v1636 = vshrl.u32 %v1635, 7
        %v1637 = vsub.s32 0, %v1636
        %v1638 = vrot.slane %v1633, %v1637
        %v1644 = vunpack.c.l.b16 %v1629
        %v1645 = vunpack.c.l.b16 %v1630
        %v1646 = vunpack.c.l.b16 %v1631
        %v1647 = vunpack.c.l.b16 %v1632
        %v1648 = vpack.c.b16 %v1645, %v1644
        %v1649 = vpack.c.b16 %v1647, %v1646
        %v1653 = vsel %vm648, %v1628, 0
        %1655 = vmatprep.subr.bf16.mxu0 0
        %1656 = vmatpush1.bf16.msra.mxu0 0
        %1657 = vmatprep.subr.bf16.mxu0 0
        %1658 = vmatpush1.bf16.msra.mxu0 0
        %1659 = vmatprep.subr.bf16.mxu0 0
        %1660 = vmatpush1.bf16.msra.mxu0 0
        %1661 = vmatprep.subr.bf16.mxu0 0
        %1662 = vmatpush1.bf16.msra.mxu0 0
        %1663 = vmatprep.subr.bf16.mxu0 0
        %1664 = vmatpush1.bf16.msra.mxu0 0
        %1665 = vmatprep.subr.bf16.mxu0 0
        %1666 = vmatpush1.bf16.msra.mxu0 0
        %1667 = vmatprep.subr.bf16.mxu0 0
        %1668 = vmatpush1.bf16.msra.mxu0 %v1649
        %1669 = vmatprep.subr.bf16.mxu0 0
        %1670 = vmatpush1.bf16.msra.mxu0 %v1648
        %1671 = vmatprep.subr.bf16.mxu0 0
        %1672 = vmatpush2.bf16.msra.mxu0 0
        %1673 = vmatprep.subr.bf16.mxu0 0
        %1674 = vmatpush2.bf16.msra.mxu0 0
        %1675 = vmatprep.subr.bf16.mxu0 0
        %1676 = vmatpush2.bf16.msra.mxu0 0
        %1677 = vmatprep.subr.bf16.mxu0 0
        %1678 = vmatpush2.bf16.msra.mxu0 0
        %1679 = vmatprep.subr.bf16.mxu0 0
        %1680 = vmatpush2.bf16.msra.mxu0 0
        %1681 = vmatprep.subr.bf16.mxu0 0
        %1682 = vmatpush2.bf16.msra.mxu0 0
        %1683 = vmatprep.subr.bf16.mxu0 0
        %1684 = vmatpush2.bf16.msra.mxu0 0
        %1685 = vmatprep.subr.bf16.mxu0 0
        %1686 = vmatpush2.bf16.msra.mxu0 0
        %1687 = vmatprep.mubr.bf16.mxu0 0
        %1688 = vmatmul.mubr.bf16.gmra.mxu0 %v1653
        %v1689 = vpop.f32.mrf.mxu0
        %v1690 = vadd.f32 %v1638, %v1689
        %v1691 = vpop.f32.mrf.mxu0
        %v1692 = vpop.f32.mrf.mxu0
        %v1693 = vpop.f32.mrf.mxu0
        %1694 = vdwg.mxu0
        %v1695 = vmul.f32 %v1690, %v1690
        %v1696 = vmul.f32 %v1690, %v1695
        %v1697 = vmul.f32 %v1696, 0.044715
        %v1698 = vadd.f32 %v1690, %v1697
        %v1699 = vmul.f32 %v1698, 0.7978846
        %v1700 = vtanh.pop %v1699
        %v1701 = vadd.f32 %v1700, 1.0
        %v1702 = vmul.f32 %v1701, 0.5
        %v1703 = vmul.f32 %v1690, %v1702
        %v1704 = vpack.c.bf16 %v1703, %v1703
        %v1705 = vld [vmem:[%s15] sm:$0xf]
        %v1706 = vld [vmem:[%s15 + $0x4] sm:$0xf]
        %v1707 = vld [vmem:[%s15 + $0x8] sm:$0xf]
        %v1708 = vld [vmem:[%s15 + $0xc] sm:$0xf]
        %v1709 = vld [vmem:[%s15 + $0x10] sm:$0xf]
        %v1710 = vld [vmem:[%s15 + $0x14] sm:$0xf]
        %v1711 = vld [vmem:[%s15 + $0x18] sm:$0xf]
        %v1712 = vld [vmem:[%s15 + $0x1c] sm:$0xf]
        %v1713 = vld [vmem:[%s15 + $0x20] sm:$0xf]
        %v1714 = vld [vmem:[%s15 + $0x24] sm:$0xf]
        %v1715 = vld [vmem:[%s15 + $0x28] sm:$0xf]
        %v1716 = vld [vmem:[%s15 + $0x2c] sm:$0xf]
        %v1717 = vld [vmem:[%s15 + $0x30] sm:$0xf]
        %v1718 = vld [vmem:[%s15 + $0x34] sm:$0xf]
        %v1719 = vld [vmem:[%s15 + $0x38] sm:$0xf]
        %v1720 = vld [vmem:[%s15 + $0x3c] sm:$0xf]
        %v1721 = vld [vmem:[%s16] sm:$0x1]
        %v1723 = vlaneseq
        %v1724 = vshrl.u32 %v1723, 7
        %v1725 = vsub.s32 0, %v1724
        %v1726 = vrot.slane %v1721, %v1725
        %v1744 = vunpack.c.l.b16 %v1705
        %v1745 = vunpack.c.l.b16 %v1706
        %v1746 = vunpack.c.l.b16 %v1707
        %v1747 = vunpack.c.l.b16 %v1708
        %v1748 = vunpack.c.l.b16 %v1709
        %v1749 = vunpack.c.l.b16 %v1710
        %v1750 = vunpack.c.l.b16 %v1711
        %v1751 = vunpack.c.l.b16 %v1712
        %v1752 = vunpack.c.l.b16 %v1713
        %v1753 = vunpack.c.l.b16 %v1714
        %v1754 = vunpack.c.l.b16 %v1715
        %v1755 = vunpack.c.l.b16 %v1716
        %v1756 = vunpack.c.l.b16 %v1717
        %v1757 = vunpack.c.l.b16 %v1718
        %v1758 = vunpack.c.l.b16 %v1719
        %v1759 = vunpack.c.l.b16 %v1720
        %v1760 = vpack.c.b16 %v1745, %v1744
        %v1761 = vpack.c.b16 %v1747, %v1746
        %v1762 = vpack.c.b16 %v1749, %v1748
        %v1763 = vpack.c.b16 %v1751, %v1750
        %v1764 = vpack.c.b16 %v1753, %v1752
        %v1765 = vpack.c.b16 %v1755, %v1754
        %v1766 = vpack.c.b16 %v1757, %v1756
        %v1767 = vpack.c.b16 %v1759, %v1758
        %1776 = vmatprep.subr.bf16.mxu0 0
        %1777 = vmatpush1.bf16.msra.mxu0 %v1767
        %1778 = vmatprep.subr.bf16.mxu0 0
        %1779 = vmatpush1.bf16.msra.mxu0 %v1766
        %1780 = vmatprep.subr.bf16.mxu0 0
        %1781 = vmatpush1.bf16.msra.mxu0 %v1765
        %1782 = vmatprep.subr.bf16.mxu0 0
        %1783 = vmatpush1.bf16.msra.mxu0 %v1764
        %1784 = vmatprep.subr.bf16.mxu0 0
        %1785 = vmatpush1.bf16.msra.mxu0 %v1763
        %1786 = vmatprep.subr.bf16.mxu0 0
        %1787 = vmatpush1.bf16.msra.mxu0 %v1762
        %1788 = vmatprep.subr.bf16.mxu0 0
        %1789 = vmatpush1.bf16.msra.mxu0 %v1761
        %1790 = vmatprep.subr.bf16.mxu0 0
        %1791 = vmatpush1.bf16.msra.mxu0 %v1760
        %1792 = vmatprep.subr.bf16.mxu0 0
        %1793 = vmatpush2.bf16.msra.mxu0 0
        %1794 = vmatprep.subr.bf16.mxu0 0
        %1795 = vmatpush2.bf16.msra.mxu0 0
        %1796 = vmatprep.subr.bf16.mxu0 0
        %1797 = vmatpush2.bf16.msra.mxu0 0
        %1798 = vmatprep.subr.bf16.mxu0 0
        %1799 = vmatpush2.bf16.msra.mxu0 0
        %1800 = vmatprep.subr.bf16.mxu0 0
        %1801 = vmatpush2.bf16.msra.mxu0 0
        %1802 = vmatprep.subr.bf16.mxu0 0
        %1803 = vmatpush2.bf16.msra.mxu0 0
        %1804 = vmatprep.subr.bf16.mxu0 0
        %1805 = vmatpush2.bf16.msra.mxu0 0
        %1806 = vmatprep.subr.bf16.mxu0 0
        %1807 = vmatpush2.bf16.msra.mxu0 0
        %1808 = vmatprep.mubr.bf16.mxu0 0
        %1809 = vmatmul.mubr.bf16.gmra.mxu0 %v1704
        %v1810 = vpop.f32.mrf.mxu0
        %v1811 = vadd.f32 %v1726, %v1810
        %v1812 = vpop.f32.mrf.mxu0
        %v1813 = vpop.f32.mrf.mxu0
        %v1814 = vpop.f32.mrf.mxu0
        %1815 = vdwg.mxu0
        %v1816 = vadd.f32 %v1598, %v1811
        %1817 = vst.msk [vmem:[%s606] sm:$0xff] %vm648, %v1816
        %s1818 = sand.u32 %s434, 1
        %s1819 = scalar_lea.sflag [#allocation3], %s1818
        %s1820 = sand.u32 %s434, 1
        %s1821 = smul.addr %s1820, 8
        %s1822 = scalar_lea.vmem [#allocation2], %s1821
        // Predicated region
        $region89: #{tpu_custom_call.1} parent=87 // pred_check
          %p1823 = pneg %p444
        $region90: #{tpu_custom_call.1} parent=87 // pred_check_branch
          %1825 = sbr.rel (%p1823) target = $region92
        $region91: #{tpu_custom_call.1} parent=87 // pred_region
          %s1827 = ssub.s32 128, 128
          %1828 = vsyncadd %s1819, %s1827
          %s1829 = sadd.s32 %s36, %s35
          %s1830 = smul.addr %s1829, 128
          %s1831 = scalar_lea.hbm %s17, %s1830
          %s1833 = sshll.u32 %s1822, 4
          %s1834 = int_to_ptr.vmem [resolvable:$true] %s1833
          %1836 = dma.vmem_to_hbm [thread:$0]  %s1834, 128, %s1831, %s1819
        $region92: #{tpu_custom_call.1} parent=87 // pred_fallthru
          _
      $region88: #{tpu_custom_call.1} parent=5 // pred_fallthru
        _
      %p1837 = scmp.le.s32.totalorder 2, %s26
      // Predicated region
      $region93: #{tpu_custom_call.1} parent=5 // pred_check
        %p1838 = pneg %p1837
      $region94: #{tpu_custom_call.1} parent=5 // pred_check_branch
        %1840 = sbr.rel (%p1838) target = $region96
      $region95: #{tpu_custom_call.1} parent=5 // pred_region
        %s1841 = ssub.s32 %s26, 2
        // Predicated region
        $region97: #{tpu_custom_call.1} parent=95 // pred_check
          %p1842 = pneg %p450
        $region98: #{tpu_custom_call.1} parent=95 // pred_check_branch
          %1844 = sbr.rel (%p1842) target = $region100
        $region99: #{tpu_custom_call.1} parent=95 // pred_region
          %s1845 = sand.u32 %s435, 1
          %s1846 = scalar_lea.sflag [#allocation3], %s1845
          %s1847 = sand.u32 %s435, 1
          %s1848 = smul.addr %s1847, 8
          %s1849 = scalar_lea.vmem [#allocation2], %s1848
          %1850 = dma.done %s1846, 128
        $region100: #{tpu_custom_call.1} parent=95 // pred_fallthru
          _
      $region96: #{tpu_custom_call.1} parent=5 // pred_fallthru
        _
    $region6: #{tpu_custom_call.1} parent=1 // loop_footer
      %s30 = sadd.s32 1, %s26
    $region7: #{tpu_custom_call.1} parent=1 // loop_footer_branch
      %25 = sbr.rel target = $region3
    $region8: #{tpu_custom_call.1} parent=1 // loop_exit
      _
    %1851 = vsyncpa [#allocation3], 1
    %s1852 = scalar_lea.sflag [#allocation3], 1
    %1853 = vsyncpa %s1852, 1

</llo_original>
